<compile_context>
chip_gen: v7x
topology: tpu7x:2x2x1
jax: 0.10.0
libtpu: 0.0.40
codegen_flags: <defaults>
</compile_context>

<pallas_src>
import functools
import math

import jax
import jax.numpy as jnp
from jax.experimental import pallas as pl
from jax.experimental.pallas import tpu as pltpu


def _enm_attn_kernel(enm_full_ref, enm_tile_ref, seq_ref,
                     w_emb_ref, b_emb_ref,
                     w_qkv_ref, b_qkv_ref,
                     w_o_ref, b_o_ref,
                     ln_g_ref, ln_b_ref,
                     w_ad_ref, b_ad_ref,
                     w_seq_ref, w_enm_ref, b_cls_ref,
                     out_ref, *, num_heads, ln_eps, fuse_qkv):
    L = enm_full_ref.shape[1]        # full key/value length
    TL = enm_tile_ref.shape[1]       # query tile length
    E = w_emb_ref.shape[1]
    dh = E // num_heads
    scale = 1.0 / math.sqrt(dh)

    x_full = enm_full_ref[0].astype(jnp.float32)   # (L, 1)  -> keys/values
    x_tile = enm_tile_ref[0].astype(jnp.float32)   # (TL, 1) -> queries + residual

    # embedding = nn.Linear(1, E): VPU broadcast mul-add (recomputing the full-L
    # embedding per query tile is cheap -- it is only (L, E) with small E).
    w_emb = w_emb_ref[...]
    b_emb = b_emb_ref[...]
    emb_full = x_full * w_emb + b_emb              # (L, E)
    emb_tile = x_tile * w_emb + b_emb              # (TL, E)

    if fuse_qkv:
        # Fused (E, 3E) in-projection; aligned lane slices (E % 128 == 0).
        w_qkv = w_qkv_ref[...]                     # (E, 3E)
        b_qkv = b_qkv_ref[...]                     # (1, 3E)
        kv = jnp.dot(emb_full, w_qkv, preferred_element_type=jnp.float32) + b_qkv
        k = kv[:, E:2 * E]
        v = kv[:, 2 * E:]
        if TL == L:
            q = kv[:, :E]
        else:
            q = (jnp.dot(emb_tile, w_qkv[:, :E],
                         preferred_element_type=jnp.float32) + b_qkv[:, :E])
    else:
        # Three separate dots (small / non-128-aligned E): avoids any cross-lane
        # realignment of the fused output.
        w_qkv = w_qkv_ref[...]                     # (3, E, E)
        b_qkv = b_qkv_ref[...]                     # (3, E)
        q = jnp.dot(emb_tile, w_qkv[0], preferred_element_type=jnp.float32) + b_qkv[0:1, :]
        k = jnp.dot(emb_full, w_qkv[1], preferred_element_type=jnp.float32) + b_qkv[1:2, :]
        v = jnp.dot(emb_full, w_qkv[2], preferred_element_type=jnp.float32) + b_qkv[2:3, :]

    # Per-head lane masks over the channel axis.
    col = jax.lax.broadcasted_iota(jnp.int32, (1, E), 1)
    cdims = (((1,), (1,)), ((), ()))               # A @ B^T (contract last dims)

    # Heads live in disjoint channel columns, so summing the masked per-head
    # outputs IS the concatenation -> single out-projection after the loop.
    concat = jnp.zeros((TL, E), jnp.float32)
    for h in range(num_heads):
        hm = ((col >= h * dh) & (col < (h + 1) * dh)).astype(jnp.float32)
        qh = q * (hm * scale)                      # scale folded into the mask
        vh = v * hm                                # keep V mask (placement in concat)
        s = jax.lax.dot_general(qh, k, cdims,      # K unmasked: qh already zeroes
                                preferred_element_type=jnp.float32)  # (TL, L)
        m = jnp.max(s, axis=-1, keepdims=True)
        p = jnp.exp(s - m)                         # unnormalized probabilities
        r = jnp.sum(p, axis=-1, keepdims=True)     # (TL, 1)
        head = jnp.dot(p, vh, preferred_element_type=jnp.float32)    # (TL, E)
        # Deferred softmax normalization: rescale the (TL,E) result instead of
        # dividing the (TL,L) matrix; reciprocal runs on the EUP slot.
        concat = concat + head * pl.reciprocal(r, approx=True)

    att = jnp.dot(concat, w_o_ref[...], preferred_element_type=jnp.float32) + b_o_ref[...]

    # Residual with the raw (pre-embedding) ENM value, then LayerNorm over E.
    y = att + x_tile
    mu = jnp.mean(y, axis=-1, keepdims=True)
    var = jnp.mean((y - mu) ** 2, axis=-1, keepdims=True)
    yn = (y - mu) * jax.lax.rsqrt(var + ln_eps)
    yn = yn * ln_g_ref[...] + ln_b_ref[...]

    # enm_adaptor = nn.Linear(E, D)
    enm_emb = (jnp.dot(yn, w_ad_ref[...], preferred_element_type=jnp.float32)
               + b_ad_ref[...])                    # (TL, D)

    # adapted_classifier on cat([seq, enm_emb], -1) == two split-weight matmuls.
    s_emb = seq_ref[0]                             # (TL, D), caller dtype
    w_enm = w_enm_ref[...]
    logits = (jnp.dot(s_emb, w_seq_ref[...], preferred_element_type=jnp.float32)
              + jnp.dot(enm_emb.astype(w_enm.dtype), w_enm,
                        preferred_element_type=jnp.float32)
              + b_cls_ref[...])                    # (TL, O_pad)
    out_ref[0] = logits.astype(out_ref.dtype)


def _pick_q_block(L, target):
    """Largest query-tile size dividing L, multiple of 8, <= target (else L)."""
    if L <= target:
        return L
    for cand in range(target, 7, -1):
        if L % cand == 0 and cand % 8 == 0:
            return cand
    return L


def _vmem_limit_bytes(L, TL, D, E, O_pad, seq_itemsize, cls_itemsize):
    f32 = 4
    # double-buffered pipeline blocks (seq tile, out tile, enm full + tile)
    pipe = 2 * (TL * D * seq_itemsize + TL * O_pad * f32 + L * f32 + TL * f32)
    # weights (constant index maps; budget 2 buffers to be conservative)
    weights = 2 * ((3 * E * E + E * E + E * D) * f32
                   + 2 * D * O_pad * cls_itemsize
                   + (8 * E + D + O_pad) * f32)
    # in-kernel temporaries: (TL,L) score/prob + (L,E)/(TL,E)/(TL,D)/(TL,O_pad)
    temps = (3 * TL * L * f32 + 8 * L * E * f32
             + 4 * TL * max(E, D) * f32 + 2 * TL * O_pad * f32)
    est = (pipe + weights + temps) * 3 // 2 + (1 << 20)
    # floor at the common 32 MiB default, cap at v7x's 64 MiB per-core VMEM.
    return int(min(max(est, 32 * 1024 * 1024), 64 * 1024 * 1024))


def enm_adapted_attention_classifier(seq_embedding, enm_input, params, *,
                                     num_heads, q_block_target=256):
    B, L, D = seq_embedding.shape
    E = params["w_emb"].shape[1]
    O = params["w_seq"].shape[1]
    assert E % num_heads == 0

    # Lane-dense output: pad the (small) class dim up to a multiple of 128 so
    # stores are unmasked vst; slice back after the call.
    O_pad = pl.cdiv(O, 128) * 128
    pad = O_pad - O
    cls_dtype = seq_embedding.dtype   # match streamed activation dtype (no silent f32 promote)
    w_seq = jnp.pad(params["w_seq"], ((0, 0), (0, pad))).astype(cls_dtype)
    w_enm = jnp.pad(params["w_enm"], ((0, 0), (0, pad))).astype(cls_dtype)
    b_cls = jnp.pad(params["b_cls"], ((0, 0), (0, pad)))

    enm = enm_input.astype(jnp.float32).reshape(B, L, 1)
    seq = seq_embedding               # stream in caller dtype (bf16 ok)

    TL = _pick_q_block(L, q_block_target)
    nT = L // TL

    fuse_qkv = (E % 128 == 0)
    if fuse_qkv:
        w_qkv = jnp.concatenate([params["w_qkv"][0], params["w_qkv"][1],
                                 params["w_qkv"][2]], axis=1)          # (E, 3E)
        b_qkv = params["b_qkv"].reshape(1, 3 * E)
        w_qkv_spec = pl.BlockSpec((E, 3 * E), lambda b, t: (0, 0))
        b_qkv_spec = pl.BlockSpec((1, 3 * E), lambda b, t: (0, 0))
    else:
        w_qkv = params["w_qkv"]                                        # (3, E, E)
        b_qkv = params["b_qkv"]                                        # (3, E)
        w_qkv_spec = pl.BlockSpec((3, E, E), lambda b, t: (0, 0, 0))
        b_qkv_spec = pl.BlockSpec((3, E), lambda b, t: (0, 0))

    kernel = functools.partial(_enm_attn_kernel, num_heads=num_heads,
                               ln_eps=1e-5, fuse_qkv=fuse_qkv)

    H = num_heads
    flops = 2 * B * (L * E + 3 * L * E * E + 4 * H * L * L * E
                     + L * E * E + L * E * D + 2 * L * D * O_pad)
    transcendentals = B * H * L * L
    bytes_accessed = (B * (L * D * seq.dtype.itemsize + L * O_pad * 4 + 2 * L * 4)
                      + (4 * E * E + E * D + 8 * E + D + O_pad) * 4
                      + 2 * D * O_pad * w_seq.dtype.itemsize)

    out = pl.pallas_call(
        kernel,
        out_shape=jax.ShapeDtypeStruct((B, L, O_pad), jnp.float32),
        grid=(B, nT),
        in_specs=[
            pl.BlockSpec((1, L, 1), lambda b, t: (b, 0, 0)),       # enm: key/value rows (resident across t)
            pl.BlockSpec((1, TL, 1), lambda b, t: (b, t, 0)),      # enm: query-tile rows
            pl.BlockSpec((1, TL, D), lambda b, t: (b, t, 0)),      # seq embedding tile
            pl.BlockSpec((1, E), lambda b, t: (0, 0)),             # embedding W.T
            pl.BlockSpec((1, E), lambda b, t: (0, 0)),             # embedding b
            w_qkv_spec,                                            # Wq/Wk/Wv
            b_qkv_spec,                                            # bq/bk/bv
            pl.BlockSpec((E, E), lambda b, t: (0, 0)),             # out_proj W.T
            pl.BlockSpec((1, E), lambda b, t: (0, 0)),             # out_proj b
            pl.BlockSpec((1, E), lambda b, t: (0, 0)),             # layernorm gamma
            pl.BlockSpec((1, E), lambda b, t: (0, 0)),             # layernorm beta
            pl.BlockSpec((E, D), lambda b, t: (0, 0)),             # enm_adaptor W.T
            pl.BlockSpec((1, D), lambda b, t: (0, 0)),             # enm_adaptor b
            pl.BlockSpec((D, O_pad), lambda b, t: (0, 0)),         # classifier W[:, :D].T
            pl.BlockSpec((D, O_pad), lambda b, t: (0, 0)),         # classifier W[:, D:].T
            pl.BlockSpec((1, O_pad), lambda b, t: (0, 0)),         # classifier bias
        ],
        out_specs=pl.BlockSpec((1, TL, O_pad), lambda b, t: (b, t, 0)),
        compiler_params=pltpu.CompilerParams(
            dimension_semantics=("parallel", "parallel"),
            vmem_limit_bytes=_vmem_limit_bytes(L, TL, D, E, O_pad,
                                               seq.dtype.itemsize,
                                               w_seq.dtype.itemsize)),
        cost_estimate=pl.CostEstimate(flops=int(flops),
                                      transcendentals=int(transcendentals),
                                      bytes_accessed=int(bytes_accessed)),
    )(enm, enm, seq, params["w_emb"], params["b_emb"], w_qkv, b_qkv,
      params["w_o"], params["b_o"], params["ln_g"], params["ln_b"],
      params["w_ad"], params["b_ad"], w_seq, w_enm, b_cls)
    return out[..., :O]


def init_params(key, seq_embedding_dim, out_dim, enm_embed_dim, num_att_heads):
    """Deterministic synthetic parameters in torch layouts, re-laid-out for the kernel."""
    D, O, E = seq_embedding_dim, out_dim, enm_embed_dim
    ks = jax.random.split(key, 12)
    emb_w = 0.1 * jax.random.normal(ks[0], (E, 1), jnp.float32)        # Linear(1, E).weight
    emb_b = 0.1 * jax.random.normal(ks[1], (E,), jnp.float32)
    in_proj_w = 0.1 * jax.random.normal(ks[2], (3 * E, E), jnp.float32)  # MHA in_proj_weight
    in_proj_b = 0.1 * jax.random.normal(ks[3], (3 * E,), jnp.float32)
    out_proj_w = 0.1 * jax.random.normal(ks[4], (E, E), jnp.float32)
    out_proj_b = 0.1 * jax.random.normal(ks[5], (E,), jnp.float32)
    ln_g = 1.0 + 0.1 * jax.random.normal(ks[6], (E,), jnp.float32)
    ln_b = 0.1 * jax.random.normal(ks[7], (E,), jnp.float32)
    ad_w = 0.1 * jax.random.normal(ks[8], (D, E), jnp.float32)         # Linear(E, D).weight
    ad_b = 0.1 * jax.random.normal(ks[9], (D,), jnp.float32)
    cls_w = 0.1 * jax.random.normal(ks[10], (O, 2 * D), jnp.float32)   # Linear(2D, O).weight
    cls_b = 0.1 * jax.random.normal(ks[11], (O,), jnp.float32)
    w_qkv = jnp.stack([in_proj_w[:E].T, in_proj_w[E:2 * E].T, in_proj_w[2 * E:].T])
    return {
        "w_emb": emb_w.T,                 # (1, E)
        "b_emb": emb_b[None, :],          # (1, E)
        "w_qkv": w_qkv,                   # (3, E, E), x @ W layout
        "b_qkv": in_proj_b.reshape(3, E), # (3, E)
        "w_o": out_proj_w.T,              # (E, E)
        "b_o": out_proj_b[None, :],       # (1, E)
        "ln_g": ln_g[None, :],            # (1, E)
        "ln_b": ln_b[None, :],            # (1, E)
        "w_ad": ad_w.T,                   # (E, D)
        "b_ad": ad_b[None, :],            # (1, D)
        "w_seq": cls_w[:, :D].T,          # (D, O)
        "w_enm": cls_w[:, D:].T,          # (D, O)
        "b_cls": cls_b[None, :],          # (1, O)
    }


def reference_forward(seq, enm, params, *, num_heads):
    """Pure-JAX reference reproducing the torch forward (eval mode, no dropout)."""
    B, L, D = seq.shape
    E = params["w_emb"].shape[1]
    dh = E // num_heads
    scale = 1.0 / math.sqrt(dh)
    x = enm.astype(jnp.float32)[:, :, None]                              # (B, L, 1)
    emb = x * params["w_emb"][None] + params["b_emb"][None]              # (B, L, E)
    q = jnp.einsum("ble,ef->blf", emb, params["w_qkv"][0]) + params["b_qkv"][0]
    k = jnp.einsum("ble,ef->blf", emb, params["w_qkv"][1]) + params["b_qkv"][1]
    v = jnp.einsum("ble,ef->blf", emb, params["w_qkv"][2]) + params["b_qkv"][2]

    def split(t):
        return t.reshape(B, L, num_heads, dh).transpose(0, 2, 1, 3)      # (B, H, L, dh)

    qh, kh, vh = split(q) * scale, split(k), split(v)
    s = jnp.einsum("bhqd,bhkd->bhqk", qh, kh)
    p = jax.nn.softmax(s, axis=-1)
    o = jnp.einsum("bhqk,bhkd->bhqd", p, vh).transpose(0, 2, 1, 3).reshape(B, L, E)
    att = jnp.einsum("ble,ef->blf", o, params["w_o"]) + params["b_o"][0]
    y = att + x
    mu = y.mean(-1, keepdims=True)
    var = ((y - mu) ** 2).mean(-1, keepdims=True)
    yn = (y - mu) * jax.lax.rsqrt(var + 1e-5)
    yn = yn * params["ln_g"][0] + params["ln_b"][0]
    enm_emb = jnp.einsum("ble,ed->bld", yn, params["w_ad"]) + params["b_ad"][0]
    logits = (jnp.einsum("bld,do->blo", seq.astype(jnp.float32), params["w_seq"])
              + jnp.einsum("bld,do->blo", enm_emb, params["w_enm"])
              + params["b_cls"][0])
    return logits


if __name__ == "__main__":
    B, L = 2, 16
    seq_embedding_dim = 32
    out_dim = 8
    enm_embed_dim = 4
    num_att_heads = 2

    key = jax.random.PRNGKey(0)
    k_seq, k_enm, k_param = jax.random.split(key, 3)
    seq_embedding = jax.random.normal(k_seq, (B, L, seq_embedding_dim), jnp.float32)
    enm_input = jax.random.normal(k_enm, (B, L), jnp.float32)

    params = init_params(k_param, seq_embedding_dim, out_dim, enm_embed_dim,
                         num_att_heads)

    logits = enm_adapted_attention_classifier(seq_embedding, enm_input, params,
                                              num_heads=num_att_heads)
    logits = jax.block_until_ready(logits)

    ref = reference_forward(seq_embedding, enm_input, params, num_heads=num_att_heads)
    assert logits.shape == (B, L, out_dim)
    max_err = float(jnp.max(jnp.abs(logits - ref)))
    # approx (EUP) reciprocal in the softmax denominator -> looser than 1e-5.
    assert max_err < 1e-2, f"max abs error {max_err}"
    print("KERNEL_OK")
</pallas_src>

<mosaic_0001>
module attributes {stable_mosaic.version = 11 : i64} {
  func.func @_enm_attn_kernel(%arg0: i32, %arg1: i32, %arg2: memref<1x16x1xf32, #tpu.memory_space<vmem>>, %arg3: memref<1x16x1xf32, #tpu.memory_space<vmem>>, %arg4: memref<1x16x32xf32, #tpu.memory_space<vmem>>, %arg5: memref<1x4xf32, #tpu.memory_space<vmem>>, %arg6: memref<1x4xf32, #tpu.memory_space<vmem>>, %arg7: memref<3x4x4xf32, #tpu.memory_space<vmem>>, %arg8: memref<3x4xf32, #tpu.memory_space<vmem>>, %arg9: memref<4x4xf32, #tpu.memory_space<vmem>>, %arg10: memref<1x4xf32, #tpu.memory_space<vmem>>, %arg11: memref<1x4xf32, #tpu.memory_space<vmem>>, %arg12: memref<1x4xf32, #tpu.memory_space<vmem>>, %arg13: memref<4x32xf32, #tpu.memory_space<vmem>>, %arg14: memref<1x32xf32, #tpu.memory_space<vmem>>, %arg15: memref<32x128xf32, #tpu.memory_space<vmem>>, %arg16: memref<32x128xf32, #tpu.memory_space<vmem>>, %arg17: memref<1x128xf32, #tpu.memory_space<vmem>>, %arg18: memref<1x16x128xf32, #tpu.memory_space<vmem>>) attributes {dimension_semantics = [#tpu.dimension_semantics<parallel>, #tpu.dimension_semantics<parallel>], iteration_bounds = array<i64: 2, 1>, scalar_prefetch = 0 : i64, scratch_operands = 0 : i64, tpu.core_type = #tpu.core_type<tc>, window_params = [{transform_indices = @transform_0, window_bounds = array<i64: 1, 16, 1>}, {transform_indices = @transform_1, window_bounds = array<i64: 1, 16, 1>}, {transform_indices = @transform_2, window_bounds = array<i64: 1, 16, 32>}, {pipeline_mode = #tpu.pipeline_mode<synchronous>, transform_indices = @transform_3, window_bounds = array<i64: 1, 4>}, {pipeline_mode = #tpu.pipeline_mode<synchronous>, transform_indices = @transform_4, window_bounds = array<i64: 1, 4>}, {pipeline_mode = #tpu.pipeline_mode<synchronous>, transform_indices = @transform_5, window_bounds = array<i64: 3, 4, 4>}, {pipeline_mode = #tpu.pipeline_mode<synchronous>, transform_indices = @transform_6, window_bounds = array<i64: 3, 4>}, {pipeline_mode = #tpu.pipeline_mode<synchronous>, transform_indices = @transform_7, window_bounds = array<i64: 4, 4>}, {pipeline_mode = #tpu.pipeline_mode<synchronous>, transform_indices = @transform_8, window_bounds = array<i64: 1, 4>}, {pipeline_mode = #tpu.pipeline_mode<synchronous>, transform_indices = @transform_9, window_bounds = array<i64: 1, 4>}, {pipeline_mode = #tpu.pipeline_mode<synchronous>, transform_indices = @transform_10, window_bounds = array<i64: 1, 4>}, {pipeline_mode = #tpu.pipeline_mode<synchronous>, transform_indices = @transform_11, window_bounds = array<i64: 4, 32>}, {pipeline_mode = #tpu.pipeline_mode<synchronous>, transform_indices = @transform_12, window_bounds = array<i64: 1, 32>}, {pipeline_mode = #tpu.pipeline_mode<synchronous>, transform_indices = @transform_13, window_bounds = array<i64: 32, 128>}, {pipeline_mode = #tpu.pipeline_mode<synchronous>, transform_indices = @transform_14, window_bounds = array<i64: 32, 128>}, {pipeline_mode = #tpu.pipeline_mode<synchronous>, transform_indices = @transform_15, window_bounds = array<i64: 1, 128>}, {transform_indices = @transform_16, window_bounds = array<i64: 1, 16, 128>}]} {
    %c0 = arith.constant 0 : index
    %c0_0 = arith.constant 0 : index
    %c0_1 = arith.constant 0 : index
    %0 = vector.load %arg2[%c0, %c0_0, %c0_1] : memref<1x16x1xf32, #tpu.memory_space<vmem>>, vector<1x16x1xf32>
    %1 = vector.shape_cast %0 : vector<1x16x1xf32> to vector<16x1xf32>
    %c0_2 = arith.constant 0 : index
    %c0_3 = arith.constant 0 : index
    %c0_4 = arith.constant 0 : index
    %2 = vector.load %arg3[%c0_2, %c0_3, %c0_4] : memref<1x16x1xf32, #tpu.memory_space<vmem>>, vector<1x16x1xf32>
    %3 = vector.shape_cast %2 : vector<1x16x1xf32> to vector<16x1xf32>
    %c0_5 = arith.constant 0 : index
    %c0_6 = arith.constant 0 : index
    %4 = vector.load %arg5[%c0_5, %c0_6] : memref<1x4xf32, #tpu.memory_space<vmem>>, vector<1x4xf32>
    %c0_7 = arith.constant 0 : index
    %c0_8 = arith.constant 0 : index
    %5 = vector.load %arg6[%c0_7, %c0_8] : memref<1x4xf32, #tpu.memory_space<vmem>>, vector<1x4xf32>
    %6 = vector.broadcast %1 : vector<16x1xf32> to vector<16x4xf32>
    %7 = vector.broadcast %4 : vector<1x4xf32> to vector<16x4xf32>
    %8 = arith.mulf %6, %7 : vector<16x4xf32>
    %9 = vector.broadcast %5 : vector<1x4xf32> to vector<16x4xf32>
    %10 = arith.addf %8, %9 : vector<16x4xf32>
    %11 = vector.broadcast %3 : vector<16x1xf32> to vector<16x4xf32>
    %12 = vector.broadcast %4 : vector<1x4xf32> to vector<16x4xf32>
    %13 = arith.mulf %11, %12 : vector<16x4xf32>
    %14 = vector.broadcast %5 : vector<1x4xf32> to vector<16x4xf32>
    %15 = arith.addf %13, %14 : vector<16x4xf32>
    %c0_9 = arith.constant 0 : index
    %c0_10 = arith.constant 0 : index
    %c0_11 = arith.constant 0 : index
    %16 = vector.load %arg7[%c0_9, %c0_10, %c0_11] : memref<3x4x4xf32, #tpu.memory_space<vmem>>, vector<3x4x4xf32>
    %c0_12 = arith.constant 0 : index
    %c0_13 = arith.constant 0 : index
    %17 = vector.load %arg8[%c0_12, %c0_13] : memref<3x4xf32, #tpu.memory_space<vmem>>, vector<3x4xf32>
    %18 = vector.extract_strided_slice %16 {offsets = [0, 0, 0], sizes = [1, 4, 4], strides = [1, 1, 1]} : vector<3x4x4xf32> to vector<1x4x4xf32>
    %19 = vector.shape_cast %18 : vector<1x4x4xf32> to vector<4x4xf32>
    %cst = arith.constant dense<0.000000e+00> : vector<16x4xf32>
    %20 = tpu.matmul %15, %19, %cst {dimension_numbers = #tpu.dot_dimension_numbers<[1], [0], [0], [1], [0, 0, 1, 1], [], []>} : vector<16x4xf32>, vector<4x4xf32>, vector<16x4xf32> -> vector<16x4xf32>
    %21 = vector.extract_strided_slice %17 {offsets = [0, 0], sizes = [1, 4], strides = [1, 1]} : vector<3x4xf32> to vector<1x4xf32>
    %22 = vector.broadcast %21 : vector<1x4xf32> to vector<16x4xf32>
    %23 = arith.addf %20, %22 : vector<16x4xf32>
    %24 = vector.extract_strided_slice %16 {offsets = [1, 0, 0], sizes = [1, 4, 4], strides = [1, 1, 1]} : vector<3x4x4xf32> to vector<1x4x4xf32>
    %25 = vector.shape_cast %24 : vector<1x4x4xf32> to vector<4x4xf32>
    %cst_14 = arith.constant dense<0.000000e+00> : vector<16x4xf32>
    %26 = tpu.matmul %10, %25, %cst_14 {dimension_numbers = #tpu.dot_dimension_numbers<[1], [0], [0], [1], [0, 0, 1, 1], [], []>} : vector<16x4xf32>, vector<4x4xf32>, vector<16x4xf32> -> vector<16x4xf32>
    %27 = vector.extract_strided_slice %17 {offsets = [1, 0], sizes = [1, 4], strides = [1, 1]} : vector<3x4xf32> to vector<1x4xf32>
    %28 = vector.broadcast %27 : vector<1x4xf32> to vector<16x4xf32>
    %29 = arith.addf %26, %28 : vector<16x4xf32>
    %30 = vector.extract_strided_slice %16 {offsets = [2, 0, 0], sizes = [1, 4, 4], strides = [1, 1, 1]} : vector<3x4x4xf32> to vector<1x4x4xf32>
    %31 = vector.shape_cast %30 : vector<1x4x4xf32> to vector<4x4xf32>
    %cst_15 = arith.constant dense<0.000000e+00> : vector<16x4xf32>
    %32 = tpu.matmul %10, %31, %cst_15 {dimension_numbers = #tpu.dot_dimension_numbers<[1], [0], [0], [1], [0, 0, 1, 1], [], []>} : vector<16x4xf32>, vector<4x4xf32>, vector<16x4xf32> -> vector<16x4xf32>
    %33 = vector.extract_strided_slice %17 {offsets = [2, 0], sizes = [1, 4], strides = [1, 1]} : vector<3x4xf32> to vector<1x4xf32>
    %34 = vector.broadcast %33 : vector<1x4xf32> to vector<16x4xf32>
    %35 = arith.addf %32, %34 : vector<16x4xf32>
    %36 = tpu.iota {dimensions = array<i32: 1>} : vector<1x4xi32>
    %cst_16 = arith.constant 0.000000e+00 : f32
    %37 = vector.broadcast %cst_16 : f32 to vector<16x4xf32>
    %c0_i32 = arith.constant 0 : i32
    %38 = vector.broadcast %c0_i32 : i32 to vector<1x4xi32>
    %39 = arith.cmpi sge, %36, %38 : vector<1x4xi32>
    %c2_i32 = arith.constant 2 : i32
    %40 = vector.broadcast %c2_i32 : i32 to vector<1x4xi32>
    %41 = arith.cmpi slt, %36, %40 : vector<1x4xi32>
    %42 = arith.andi %39, %41 : vector<1x4xi1>
    %43 = arith.extui %42 : vector<1x4xi1> to vector<1x4xi32>
    %44 = arith.sitofp %43 : vector<1x4xi32> to vector<1x4xf32>
    %cst_17 = arith.constant 0.707106769 : f32
    %45 = vector.broadcast %cst_17 : f32 to vector<1x4xf32>
    %46 = arith.mulf %44, %45 : vector<1x4xf32>
    %47 = vector.broadcast %46 : vector<1x4xf32> to vector<16x4xf32>
    %48 = arith.mulf %23, %47 : vector<16x4xf32>
    %49 = vector.broadcast %44 : vector<1x4xf32> to vector<16x4xf32>
    %50 = arith.mulf %35, %49 : vector<16x4xf32>
    %cst_18 = arith.constant dense<0.000000e+00> : vector<16x16xf32>
    %51 = tpu.matmul %48, %29, %cst_18 {dimension_numbers = #tpu.dot_dimension_numbers<[1], [1], [0], [0], [0, 0, 1, 0], [], []>} : vector<16x4xf32>, vector<16x4xf32>, vector<16x16xf32> -> vector<16x16xf32>
    %cst_19 = arith.constant dense<0xFF800000> : vector<16xf32>
    %52 = vector.multi_reduction <maximumf>, %51, %cst_19 [1] : vector<16x16xf32> to vector<16xf32>
    %53 = vector.shape_cast %52 : vector<16xf32> to vector<16x1xf32>
    %54 = vector.broadcast %53 : vector<16x1xf32> to vector<16x16xf32>
    %55 = arith.subf %51, %54 : vector<16x16xf32>
    %56 = math.exp %55 : vector<16x16xf32>
    %cst_20 = arith.constant dense<0.000000e+00> : vector<16xf32>
    %57 = vector.multi_reduction <add>, %56, %cst_20 [1] : vector<16x16xf32> to vector<16xf32>
    %58 = vector.shape_cast %57 : vector<16xf32> to vector<16x1xf32>
    %cst_21 = arith.constant dense<0.000000e+00> : vector<16x4xf32>
    %59 = tpu.matmul %56, %50, %cst_21 {dimension_numbers = #tpu.dot_dimension_numbers<[1], [0], [0], [1], [0, 0, 1, 1], [], []>} : vector<16x16xf32>, vector<16x4xf32>, vector<16x4xf32> -> vector<16x4xf32>
    %60 = tpu.reciprocal %58 {approx = true} : vector<16x1xf32> -> vector<16x1xf32>
    %61 = vector.broadcast %60 : vector<16x1xf32> to vector<16x4xf32>
    %62 = arith.mulf %59, %61 : vector<16x4xf32>
    %63 = arith.addf %37, %62 : vector<16x4xf32>
    %c2_i32_22 = arith.constant 2 : i32
    %64 = vector.broadcast %c2_i32_22 : i32 to vector<1x4xi32>
    %65 = arith.cmpi sge, %36, %64 : vector<1x4xi32>
    %c4_i32 = arith.constant 4 : i32
    %66 = vector.broadcast %c4_i32 : i32 to vector<1x4xi32>
    %67 = arith.cmpi slt, %36, %66 : vector<1x4xi32>
    %68 = arith.andi %65, %67 : vector<1x4xi1>
    %69 = arith.extui %68 : vector<1x4xi1> to vector<1x4xi32>
    %70 = arith.sitofp %69 : vector<1x4xi32> to vector<1x4xf32>
    %cst_23 = arith.constant 0.707106769 : f32
    %71 = vector.broadcast %cst_23 : f32 to vector<1x4xf32>
    %72 = arith.mulf %70, %71 : vector<1x4xf32>
    %73 = vector.broadcast %72 : vector<1x4xf32> to vector<16x4xf32>
    %74 = arith.mulf %23, %73 : vector<16x4xf32>
    %75 = vector.broadcast %70 : vector<1x4xf32> to vector<16x4xf32>
    %76 = arith.mulf %35, %75 : vector<16x4xf32>
    %cst_24 = arith.constant dense<0.000000e+00> : vector<16x16xf32>
    %77 = tpu.matmul %74, %29, %cst_24 {dimension_numbers = #tpu.dot_dimension_numbers<[1], [1], [0], [0], [0, 0, 1, 0], [], []>} : vector<16x4xf32>, vector<16x4xf32>, vector<16x16xf32> -> vector<16x16xf32>
    %cst_25 = arith.constant dense<0xFF800000> : vector<16xf32>
    %78 = vector.multi_reduction <maximumf>, %77, %cst_25 [1] : vector<16x16xf32> to vector<16xf32>
    %79 = vector.shape_cast %78 : vector<16xf32> to vector<16x1xf32>
    %80 = vector.broadcast %79 : vector<16x1xf32> to vector<16x16xf32>
    %81 = arith.subf %77, %80 : vector<16x16xf32>
    %82 = math.exp %81 : vector<16x16xf32>
    %cst_26 = arith.constant dense<0.000000e+00> : vector<16xf32>
    %83 = vector.multi_reduction <add>, %82, %cst_26 [1] : vector<16x16xf32> to vector<16xf32>
    %84 = vector.shape_cast %83 : vector<16xf32> to vector<16x1xf32>
    %cst_27 = arith.constant dense<0.000000e+00> : vector<16x4xf32>
    %85 = tpu.matmul %82, %76, %cst_27 {dimension_numbers = #tpu.dot_dimension_numbers<[1], [0], [0], [1], [0, 0, 1, 1], [], []>} : vector<16x16xf32>, vector<16x4xf32>, vector<16x4xf32> -> vector<16x4xf32>
    %86 = tpu.reciprocal %84 {approx = true} : vector<16x1xf32> -> vector<16x1xf32>
    %87 = vector.broadcast %86 : vector<16x1xf32> to vector<16x4xf32>
    %88 = arith.mulf %85, %87 : vector<16x4xf32>
    %89 = arith.addf %63, %88 : vector<16x4xf32>
    %c0_28 = arith.constant 0 : index
    %c0_29 = arith.constant 0 : index
    %90 = vector.load %arg9[%c0_28, %c0_29] : memref<4x4xf32, #tpu.memory_space<vmem>>, vector<4x4xf32>
    %cst_30 = arith.constant dense<0.000000e+00> : vector<16x4xf32>
    %91 = tpu.matmul %89, %90, %cst_30 {dimension_numbers = #tpu.dot_dimension_numbers<[1], [0], [0], [1], [0, 0, 1, 1], [], []>} : vector<16x4xf32>, vector<4x4xf32>, vector<16x4xf32> -> vector<16x4xf32>
    %c0_31 = arith.constant 0 : index
    %c0_32 = arith.constant 0 : index
    %92 = vector.load %arg10[%c0_31, %c0_32] : memref<1x4xf32, #tpu.memory_space<vmem>>, vector<1x4xf32>
    %93 = vector.broadcast %92 : vector<1x4xf32> to vector<16x4xf32>
    %94 = arith.addf %91, %93 : vector<16x4xf32>
    %95 = vector.broadcast %3 : vector<16x1xf32> to vector<16x4xf32>
    %96 = arith.addf %94, %95 : vector<16x4xf32>
    %cst_33 = arith.constant dense<0.000000e+00> : vector<16xf32>
    %97 = vector.multi_reduction <add>, %96, %cst_33 [1] : vector<16x4xf32> to vector<16xf32>
    %98 = vector.shape_cast %97 : vector<16xf32> to vector<16x1xf32>
    %cst_34 = arith.constant 4.000000e+00 : f32
    %99 = vector.broadcast %cst_34 : f32 to vector<16x1xf32>
    %100 = arith.divf %98, %99 : vector<16x1xf32>
    %101 = vector.broadcast %100 : vector<16x1xf32> to vector<16x4xf32>
    %102 = arith.subf %96, %101 : vector<16x4xf32>
    %103 = arith.mulf %102, %102 : vector<16x4xf32>
    %cst_35 = arith.constant dense<0.000000e+00> : vector<16xf32>
    %104 = vector.multi_reduction <add>, %103, %cst_35 [1] : vector<16x4xf32> to vector<16xf32>
    %105 = vector.shape_cast %104 : vector<16xf32> to vector<16x1xf32>
    %cst_36 = arith.constant 4.000000e+00 : f32
    %106 = vector.broadcast %cst_36 : f32 to vector<16x1xf32>
    %107 = arith.divf %105, %106 : vector<16x1xf32>
    %108 = vector.broadcast %100 : vector<16x1xf32> to vector<16x4xf32>
    %109 = arith.subf %96, %108 : vector<16x4xf32>
    %cst_37 = arith.constant 9.99999974E-6 : f32
    %110 = vector.broadcast %cst_37 : f32 to vector<16x1xf32>
    %111 = arith.addf %107, %110 : vector<16x1xf32>
    %112 = math.rsqrt %111 : vector<16x1xf32>
    %113 = vector.broadcast %112 : vector<16x1xf32> to vector<16x4xf32>
    %114 = arith.mulf %109, %113 : vector<16x4xf32>
    %c0_38 = arith.constant 0 : index
    %c0_39 = arith.constant 0 : index
    %115 = vector.load %arg11[%c0_38, %c0_39] : memref<1x4xf32, #tpu.memory_space<vmem>>, vector<1x4xf32>
    %116 = vector.broadcast %115 : vector<1x4xf32> to vector<16x4xf32>
    %117 = arith.mulf %114, %116 : vector<16x4xf32>
    %c0_40 = arith.constant 0 : index
    %c0_41 = arith.constant 0 : index
    %118 = vector.load %arg12[%c0_40, %c0_41] : memref<1x4xf32, #tpu.memory_space<vmem>>, vector<1x4xf32>
    %119 = vector.broadcast %118 : vector<1x4xf32> to vector<16x4xf32>
    %120 = arith.addf %117, %119 : vector<16x4xf32>
    %c0_42 = arith.constant 0 : index
    %c0_43 = arith.constant 0 : index
    %121 = vector.load %arg13[%c0_42, %c0_43] : memref<4x32xf32, #tpu.memory_space<vmem>>, vector<4x32xf32>
    %cst_44 = arith.constant dense<0.000000e+00> : vector<16x32xf32>
    %122 = tpu.matmul %120, %121, %cst_44 {dimension_numbers = #tpu.dot_dimension_numbers<[1], [0], [0], [1], [0, 0, 1, 1], [], []>} : vector<16x4xf32>, vector<4x32xf32>, vector<16x32xf32> -> vector<16x32xf32>
    %c0_45 = arith.constant 0 : index
    %c0_46 = arith.constant 0 : index
    %123 = vector.load %arg14[%c0_45, %c0_46] : memref<1x32xf32, #tpu.memory_space<vmem>>, vector<1x32xf32>
    %124 = vector.broadcast %123 : vector<1x32xf32> to vector<16x32xf32>
    %125 = arith.addf %122, %124 : vector<16x32xf32>
    %c0_47 = arith.constant 0 : index
    %c0_48 = arith.constant 0 : index
    %c0_49 = arith.constant 0 : index
    %126 = vector.load %arg4[%c0_47, %c0_48, %c0_49] : memref<1x16x32xf32, #tpu.memory_space<vmem>>, vector<1x16x32xf32>
    %127 = vector.shape_cast %126 : vector<1x16x32xf32> to vector<16x32xf32>
    %c0_50 = arith.constant 0 : index
    %c0_51 = arith.constant 0 : index
    %128 = vector.load %arg16[%c0_50, %c0_51] : memref<32x128xf32, #tpu.memory_space<vmem>>, vector<32x128xf32>
    %c0_52 = arith.constant 0 : index
    %c0_53 = arith.constant 0 : index
    %129 = vector.load %arg15[%c0_52, %c0_53] : memref<32x128xf32, #tpu.memory_space<vmem>>, vector<32x128xf32>
    %cst_54 = arith.constant dense<0.000000e+00> : vector<16x128xf32>
    %130 = tpu.matmul %127, %129, %cst_54 {dimension_numbers = #tpu.dot_dimension_numbers<[1], [0], [0], [1], [0, 0, 1, 1], [], []>} : vector<16x32xf32>, vector<32x128xf32>, vector<16x128xf32> -> vector<16x128xf32>
    %cst_55 = arith.constant dense<0.000000e+00> : vector<16x128xf32>
    %131 = tpu.matmul %125, %128, %cst_55 {dimension_numbers = #tpu.dot_dimension_numbers<[1], [0], [0], [1], [0, 0, 1, 1], [], []>} : vector<16x32xf32>, vector<32x128xf32>, vector<16x128xf32> -> vector<16x128xf32>
    %132 = arith.addf %130, %131 : vector<16x128xf32>
    %c0_56 = arith.constant 0 : index
    %c0_57 = arith.constant 0 : index
    %133 = vector.load %arg17[%c0_56, %c0_57] : memref<1x128xf32, #tpu.memory_space<vmem>>, vector<1x128xf32>
    %134 = vector.broadcast %133 : vector<1x128xf32> to vector<16x128xf32>
    %135 = arith.addf %132, %134 : vector<16x128xf32>
    %c0_58 = arith.constant 0 : index
    %c0_59 = arith.constant 0 : index
    %c0_60 = arith.constant 0 : index
    %136 = vector.load %arg18[%c0_58, %c0_59, %c0_60] : memref<1x16x128xf32, #tpu.memory_space<vmem>>, vector<1x16x128xf32>
    %137 = vector.shape_cast %136 : vector<1x16x128xf32> to vector<16x128xf32>
    %138 = vector.shape_cast %135 : vector<16x128xf32> to vector<1x16x128xf32>
    tpu.vector_store %arg18[%c0_58, %c0_59, %c0_60], %138 {strides = array<i32>} : memref<1x16x128xf32, #tpu.memory_space<vmem>>, vector<1x16x128xf32>,
    return
  }
  func.func @transform_0(%arg0: i32, %arg1: i32) -> (i32, i32, i32) {
    %c0_i32 = arith.constant 0 : i32
    %c0_i32_0 = arith.constant 0 : i32
    %c0_i32_1 = arith.constant 0 : i32
    return %arg0, %c0_i32, %c0_i32_0 : i32, i32, i32
  }
  func.func @transform_1(%arg0: i32, %arg1: i32) -> (i32, i32, i32) {
    %c0_i32 = arith.constant 0 : i32
    %c0_i32_0 = arith.constant 0 : i32
    return %arg0, %arg1, %c0_i32 : i32, i32, i32
  }
  func.func @transform_2(%arg0: i32, %arg1: i32) -> (i32, i32, i32) {
    %c0_i32 = arith.constant 0 : i32
    %c0_i32_0 = arith.constant 0 : i32
    return %arg0, %arg1, %c0_i32 : i32, i32, i32
  }
  func.func @transform_3(%arg0: i32, %arg1: i32) -> (i32, i32) {
    %c0_i32 = arith.constant 0 : i32
    %c0_i32_0 = arith.constant 0 : i32
    %c0_i32_1 = arith.constant 0 : i32
    return %c0_i32, %c0_i32_0 : i32, i32
  }
  func.func @transform_4(%arg0: i32, %arg1: i32) -> (i32, i32) {
    %c0_i32 = arith.constant 0 : i32
    %c0_i32_0 = arith.constant 0 : i32
    %c0_i32_1 = arith.constant 0 : i32
    return %c0_i32, %c0_i32_0 : i32, i32
  }
  func.func @transform_5(%arg0: i32, %arg1: i32) -> (i32, i32, i32) {
    %c0_i32 = arith.constant 0 : i32
    %c0_i32_0 = arith.constant 0 : i32
    %c0_i32_1 = arith.constant 0 : i32
    %c0_i32_2 = arith.constant 0 : i32
    return %c0_i32, %c0_i32_0, %c0_i32_1 : i32, i32, i32
  }
  func.func @transform_6(%arg0: i32, %arg1: i32) -> (i32, i32) {
    %c0_i32 = arith.constant 0 : i32
    %c0_i32_0 = arith.constant 0 : i32
    %c0_i32_1 = arith.constant 0 : i32
    return %c0_i32, %c0_i32_0 : i32, i32
  }
  func.func @transform_7(%arg0: i32, %arg1: i32) -> (i32, i32) {
    %c0_i32 = arith.constant 0 : i32
    %c0_i32_0 = arith.constant 0 : i32
    %c0_i32_1 = arith.constant 0 : i32
    return %c0_i32, %c0_i32_0 : i32, i32
  }
  func.func @transform_8(%arg0: i32, %arg1: i32) -> (i32, i32) {
    %c0_i32 = arith.constant 0 : i32
    %c0_i32_0 = arith.constant 0 : i32
    %c0_i32_1 = arith.constant 0 : i32
    return %c0_i32, %c0_i32_0 : i32, i32
  }
  func.func @transform_9(%arg0: i32, %arg1: i32) -> (i32, i32) {
    %c0_i32 = arith.constant 0 : i32
    %c0_i32_0 = arith.constant 0 : i32
    %c0_i32_1 = arith.constant 0 : i32
    return %c0_i32, %c0_i32_0 : i32, i32
  }
  func.func @transform_10(%arg0: i32, %arg1: i32) -> (i32, i32) {
    %c0_i32 = arith.constant 0 : i32
    %c0_i32_0 = arith.constant 0 : i32
    %c0_i32_1 = arith.constant 0 : i32
    return %c0_i32, %c0_i32_0 : i32, i32
  }
  func.func @transform_11(%arg0: i32, %arg1: i32) -> (i32, i32) {
    %c0_i32 = arith.constant 0 : i32
    %c0_i32_0 = arith.constant 0 : i32
    %c0_i32_1 = arith.constant 0 : i32
    return %c0_i32, %c0_i32_0 : i32, i32
  }
  func.func @transform_12(%arg0: i32, %arg1: i32) -> (i32, i32) {
    %c0_i32 = arith.constant 0 : i32
    %c0_i32_0 = arith.constant 0 : i32
    %c0_i32_1 = arith.constant 0 : i32
    return %c0_i32, %c0_i32_0 : i32, i32
  }
  func.func @transform_13(%arg0: i32, %arg1: i32) -> (i32, i32) {
    %c0_i32 = arith.constant 0 : i32
    %c0_i32_0 = arith.constant 0 : i32
    %c0_i32_1 = arith.constant 0 : i32
    return %c0_i32, %c0_i32_0 : i32, i32
  }
  func.func @transform_14(%arg0: i32, %arg1: i32) -> (i32, i32) {
    %c0_i32 = arith.constant 0 : i32
    %c0_i32_0 = arith.constant 0 : i32
    %c0_i32_1 = arith.constant 0 : i32
    return %c0_i32, %c0_i32_0 : i32, i32
  }
  func.func @transform_15(%arg0: i32, %arg1: i32) -> (i32, i32) {
    %c0_i32 = arith.constant 0 : i32
    %c0_i32_0 = arith.constant 0 : i32
    %c0_i32_1 = arith.constant 0 : i32
    return %c0_i32, %c0_i32_0 : i32, i32
  }
  func.func @transform_16(%arg0: i32, %arg1: i32) -> (i32, i32, i32) {
    %c0_i32 = arith.constant 0 : i32
    %c0_i32_0 = arith.constant 0 : i32
    return %arg0, %arg1, %c0_i32 : i32, i32, i32
  }
}

</mosaic_0001>

<llo_original>
// kernel: tpu_custom_call.1
$region0: #{tpu_custom_call.1}
  #allocation0 [shape = 'u32[]', space=smem, size = 0x4, offset = 0x4, fixed_abs, tag = 'smem constant byte address 0x4 - core index']
  #allocation1 [shape = 'u32[144,128]{1,0:T(1,128)}', space=vmem, size = 0x12000, scoped, tag = 'internal scratch']
  %s0 = inlined_call_operand.vmem [shape: f32[2,16,1], index: 0, kind: input, shape index: {}]
  %s1 = inlined_call_operand.vmem [shape: f32[2,16,1], index: 1, kind: input, shape index: {}]
  %s2 = inlined_call_operand.vmem [shape: f32[2,16,32], index: 2, kind: input, shape index: {}]
  %s3 = inlined_call_operand.hbm [shape: f32[1,4], index: 3, kind: input, shape index: {}]
  %s4 = inlined_call_operand.hbm [shape: f32[1,4], index: 4, kind: input, shape index: {}]
  %s5 = inlined_call_operand.hbm [shape: f32[3,4,4], index: 5, kind: input, shape index: {}]
  %s6 = inlined_call_operand.hbm [shape: f32[3,4], index: 6, kind: input, shape index: {}]
  %s7 = inlined_call_operand.hbm [shape: f32[4,4], index: 7, kind: input, shape index: {}]
  %s8 = inlined_call_operand.hbm [shape: f32[1,4], index: 8, kind: input, shape index: {}]
  %s9 = inlined_call_operand.hbm [shape: f32[1,4], index: 9, kind: input, shape index: {}]
  %s10 = inlined_call_operand.vmem [shape: f32[1,4], index: 10, kind: input, shape index: {}]
  %s11 = inlined_call_operand.vmem [shape: f32[4,32], index: 11, kind: input, shape index: {}]
  %s12 = inlined_call_operand.vmem [shape: f32[1,32], index: 12, kind: input, shape index: {}]
  %s13 = inlined_call_operand.vmem [shape: f32[32,128], index: 13, kind: input, shape index: {}]
  %s14 = inlined_call_operand.vmem [shape: f32[32,128], index: 14, kind: input, shape index: {}]
  %s15 = inlined_call_operand.vmem [shape: f32[1,128], index: 15, kind: input, shape index: {}]
  %s16 = inlined_call_operand.hbm [shape: f32[2,16,128], index: 16, kind: output, shape index: {}]
  %s17 = sld [smem:[#allocation0]]
  $region125: #{tpu_custom_call.1} parent=0
    _
  %s19 = ssub.s32 1, %s17
  %s20 = scalar_select 0, %s19, %s17
  $region1: #{tpu_custom_call.1} parent=0
    #allocation2 [shape = 'u8[512]{0}', space=vmem, size = 0x400, scoped, tag = 'input window, operand 3, single buffered']
    #allocation3 [shape = 's32[2]{0}', space=sflag, size = 0x8, scoped, tag = 'scoped memory for tpu_custom_call.1']
    #allocation4 [shape = 's32[2]{0}', space=sflag, size = 0x8, scoped, tag = 'scoped memory for tpu_custom_call.1']
    #allocation5 [shape = 'u8[512]{0}', space=vmem, size = 0x400, scoped, tag = 'input window, operand 4, single buffered']
    #allocation6 [shape = 's32[1]{0}', space=sflag, size = 0x4, scoped, tag = 'scoped memory for tpu_custom_call.1']
    #allocation7 [shape = 'u8[6144]{0}', space=vmem, size = 0x1800, scoped, tag = 'input window, operand 5, single buffered']
    #allocation8 [shape = 'u8[2048]{0}', space=vmem, size = 0x800, scoped, tag = 'input window, operand 6, single buffered']
    #allocation9 [shape = 's32[1]{0}', space=sflag, size = 0x4, scoped, tag = 'scoped memory for tpu_custom_call.1']
    #allocation10 [shape = 'u8[2048]{0}', space=vmem, size = 0x800, scoped, tag = 'input window, operand 7, single buffered']
    #allocation11 [shape = 'u8[512]{0}', space=vmem, size = 0x400, scoped, tag = 'input window, operand 8, single buffered']
    #allocation12 [shape = 's32[1]{0}', space=sflag, size = 0x4, scoped, tag = 'scoped memory for tpu_custom_call.1']
    #allocation13 [shape = 'u8[512]{0}', space=vmem, size = 0x400, scoped, tag = 'input window, operand 9, single buffered']
    #allocation14 [shape = 'u8[16384]{0}', space=vmem, size = 0x4000, scoped, tag = 'output window, operand 0']
    %21 = vsyncpa [#allocation3], 0
    %22 = vsyncpa [#allocation6], 0
    %23 = vsyncpa [#allocation9], 0
    %24 = vsyncpa [#allocation12], 0
    %25 = vsyncpa [#allocation4], 0
    %s26 = scalar_lea.sflag [#allocation4], 1
    %27 = vsyncpa %s26, 0
    loop: start=0, step=1, limit=4
    $region2: #{tpu_custom_call.1} parent=1 // loop_pre_header
      _
    $region3: #{tpu_custom_call.1} parent=1 // loop_header
      %s29 = sphi 0, %s33
      %p30 = scmp.ge.s32.totalorder %s29, 4
      %s36 = sphi 0, %s48
      %s37 = sphi 0, %s44
      %s38 = sphi 0, %s36
      %s39 = sphi 0, %s37
      %s40 = sphi 0, %s38
      %s41 = sphi 0, %s39
      %s51 = sphi 0, %s53
      %s54 = sphi 0, %s51
      %s55 = sphi 0, %s54
      %s71 = sphi 0, %s55
      %s79 = sphi 0, %s81
      %s82 = sphi 0, %s79
      %s83 = sphi 0, %s82
      %s99 = sphi 0, %s83
      %s107 = sphi 0, %s109
      %s110 = sphi 0, %s107
      %s111 = sphi 0, %s110
      %s127 = sphi 0, %s111
      %s131 = sphi 0, %s131
      %s133 = sphi 0, %s131
      %s134 = sphi 0, %s133
      %s148 = sphi 0, %s134
      %s152 = sphi 0, %s152
      %s154 = sphi 0, %s152
      %s155 = sphi 0, %s154
      %s169 = sphi 0, %s155
      %s173 = sphi 0, %s173
      %s175 = sphi 0, %s173
      %s176 = sphi 0, %s175
      %s190 = sphi 0, %s176
      %s194 = sphi 0, %s194
      %s196 = sphi 0, %s194
      %s197 = sphi 0, %s196
      %s211 = sphi 0, %s197
      %s215 = sphi 0, %s215
      %s217 = sphi 0, %s215
      %s218 = sphi 0, %s217
      %s232 = sphi 0, %s218
      %s236 = sphi 0, %s236
      %s238 = sphi 0, %s236
      %s239 = sphi 0, %s238
      %s253 = sphi 0, %s239
      %s257 = sphi 0, %s257
      %s259 = sphi 0, %s257
      %s260 = sphi 0, %s259
      %s274 = sphi 0, %s260
      %s278 = sphi 0, %s278
      %s280 = sphi 0, %s278
      %s281 = sphi 0, %s280
      %s295 = sphi 0, %s281
      %s299 = sphi 0, %s299
      %s301 = sphi 0, %s299
      %s302 = sphi 0, %s301
      %s316 = sphi 0, %s302
      %s320 = sphi 0, %s320
      %s322 = sphi 0, %s320
      %s323 = sphi 0, %s322
      %s337 = sphi 0, %s323
      %s341 = sphi 0, %s341
      %s343 = sphi 0, %s341
      %s344 = sphi 0, %s343
      %s358 = sphi 0, %s344
      %s362 = sphi 0, %s362
      %s364 = sphi 0, %s362
      %s365 = sphi 0, %s364
      %s379 = sphi 0, %s365
      %s383 = sphi 0, %s383
      %s385 = sphi 0, %s383
      %s386 = sphi 0, %s385
      %s400 = sphi 0, %s386
      %s408 = sphi 0, %s410
      %s411 = sphi 0, %s408
      %s412 = sphi 0, %s411
      %s428 = sphi 0, %s412
    $region4: #{tpu_custom_call.1} parent=1 // loop_header_branch
      %32 = sbr.rel (%p30) target = $region8
    $region5: #{tpu_custom_call.1} parent=1 // loop_body
      %s34 = ssub.s32 %s29, 1
      %s35 = ssub.s32 %s29, 2
      %s42 = sadd.s32 1, %s37
      %p43 = scmp.ge.s32.totalorder %s42, 1
      %s44 = scalar_select %p43, 0, %s42
      %s45 = sadd.s32 1, %s36
      %s46 = scalar_select %p43, %s45, %s36
      %p47 = scmp.ge.s32.totalorder %s46, 2
      %s48 = scalar_select %p47, 0, %s46
      %s49 = ssub.s32 %s36, %s48
      %p50 = scmp.eq.s32.totalorder %s49, 0
      %s52 = sadd.s32 %s51, 1
      %s53 = scalar_select %p50, %s51, %s52
      %p56 = pneg %p50
      %p57 = scmp.eq.s32.totalorder %s29, 1
      %p58 = por %p56, %p57
      %p59 = scmp.ne.s32.totalorder %s51, %s54
      %p60 = scmp.eq.s32.totalorder %s29, 0
      %p61 = por %p59, %p60
      %p62 = scmp.ne.s32.totalorder %s51, %s54
      %p63 = scmp.eq.s32.totalorder %s34, 1
      %p64 = por %p62, %p63
      %p65 = scmp.ne.s32.totalorder %s54, %s55
      %p66 = scmp.eq.s32.totalorder %s34, 0
      %p67 = por %p65, %p66
      %p68 = scmp.ne.s32.totalorder %s54, %s55
      %p69 = scmp.eq.s32.totalorder %s35, 1
      %p70 = por %p68, %p69
      %p72 = scmp.ne.s32.totalorder %s55, %s71
      %p73 = scmp.eq.s32.totalorder %s35, 0
      %p74 = por %p72, %p73
      %s75 = ssub.s32 %s36, %s48
      %s76 = ssub.s32 %s37, %s44
      %s77 = sor.u32 %s75, %s76
      %p78 = scmp.eq.s32.totalorder %s77, 0
      %s80 = sadd.s32 %s79, 1
      %s81 = scalar_select %p78, %s79, %s80
      %p84 = pneg %p78
      %p85 = scmp.eq.s32.totalorder %s29, 1
      %p86 = por %p84, %p85
      %p87 = scmp.ne.s32.totalorder %s79, %s82
      %p88 = scmp.eq.s32.totalorder %s29, 0
      %p89 = por %p87, %p88
      %p90 = scmp.ne.s32.totalorder %s79, %s82
      %p91 = scmp.eq.s32.totalorder %s34, 1
      %p92 = por %p90, %p91
      %p93 = scmp.ne.s32.totalorder %s82, %s83
      %p94 = scmp.eq.s32.totalorder %s34, 0
      %p95 = por %p93, %p94
      %p96 = scmp.ne.s32.totalorder %s82, %s83
      %p97 = scmp.eq.s32.totalorder %s35, 1
      %p98 = por %p96, %p97
      %p100 = scmp.ne.s32.totalorder %s83, %s99
      %p101 = scmp.eq.s32.totalorder %s35, 0
      %p102 = por %p100, %p101
      %s103 = ssub.s32 %s36, %s48
      %s104 = ssub.s32 %s37, %s44
      %s105 = sor.u32 %s103, %s104
      %p106 = scmp.eq.s32.totalorder %s105, 0
      %s108 = sadd.s32 %s107, 1
      %s109 = scalar_select %p106, %s107, %s108
      %p112 = pneg %p106
      %p113 = scmp.eq.s32.totalorder %s29, 1
      %p114 = por %p112, %p113
      %p115 = scmp.ne.s32.totalorder %s107, %s110
      %p116 = scmp.eq.s32.totalorder %s29, 0
      %p117 = por %p115, %p116
      %p118 = scmp.ne.s32.totalorder %s107, %s110
      %p119 = scmp.eq.s32.totalorder %s34, 1
      %p120 = por %p118, %p119
      %p121 = scmp.ne.s32.totalorder %s110, %s111
      %p122 = scmp.eq.s32.totalorder %s34, 0
      %p123 = por %p121, %p122
      %p124 = scmp.ne.s32.totalorder %s110, %s111
      %p125 = scmp.eq.s32.totalorder %s35, 1
      %p126 = por %p124, %p125
      %p128 = scmp.ne.s32.totalorder %s111, %s127
      %p129 = scmp.eq.s32.totalorder %s35, 0
      %p130 = por %p128, %p129
      %s132 = sadd.s32 %s131, 1
      %p135 = scmp.eq.s32.totalorder %s29, 1
      %p136 = scmp.ne.s32.totalorder %s131, %s133
      %p137 = scmp.eq.s32.totalorder %s29, 0
      %p138 = por %p136, %p137
      %p139 = scmp.ne.s32.totalorder %s131, %s133
      %p140 = scmp.eq.s32.totalorder %s34, 1
      %p141 = por %p139, %p140
      %p142 = scmp.ne.s32.totalorder %s133, %s134
      %p143 = scmp.eq.s32.totalorder %s34, 0
      %p144 = por %p142, %p143
      %p145 = scmp.ne.s32.totalorder %s133, %s134
      %p146 = scmp.eq.s32.totalorder %s35, 1
      %p147 = por %p145, %p146
      %p149 = scmp.ne.s32.totalorder %s134, %s148
      %p150 = scmp.eq.s32.totalorder %s35, 0
      %p151 = por %p149, %p150
      %s153 = sadd.s32 %s152, 1
      %p156 = scmp.eq.s32.totalorder %s29, 1
      %p157 = scmp.ne.s32.totalorder %s152, %s154
      %p158 = scmp.eq.s32.totalorder %s29, 0
      %p159 = por %p157, %p158
      %p160 = scmp.ne.s32.totalorder %s152, %s154
      %p161 = scmp.eq.s32.totalorder %s34, 1
      %p162 = por %p160, %p161
      %p163 = scmp.ne.s32.totalorder %s154, %s155
      %p164 = scmp.eq.s32.totalorder %s34, 0
      %p165 = por %p163, %p164
      %p166 = scmp.ne.s32.totalorder %s154, %s155
      %p167 = scmp.eq.s32.totalorder %s35, 1
      %p168 = por %p166, %p167
      %p170 = scmp.ne.s32.totalorder %s155, %s169
      %p171 = scmp.eq.s32.totalorder %s35, 0
      %p172 = por %p170, %p171
      %s174 = sadd.s32 %s173, 1
      %p177 = scmp.eq.s32.totalorder %s29, 1
      %p178 = scmp.ne.s32.totalorder %s173, %s175
      %p179 = scmp.eq.s32.totalorder %s29, 0
      %p180 = por %p178, %p179
      %p181 = scmp.ne.s32.totalorder %s173, %s175
      %p182 = scmp.eq.s32.totalorder %s34, 1
      %p183 = por %p181, %p182
      %p184 = scmp.ne.s32.totalorder %s175, %s176
      %p185 = scmp.eq.s32.totalorder %s34, 0
      %p186 = por %p184, %p185
      %p187 = scmp.ne.s32.totalorder %s175, %s176
      %p188 = scmp.eq.s32.totalorder %s35, 1
      %p189 = por %p187, %p188
      %p191 = scmp.ne.s32.totalorder %s176, %s190
      %p192 = scmp.eq.s32.totalorder %s35, 0
      %p193 = por %p191, %p192
      %s195 = sadd.s32 %s194, 1
      %p198 = scmp.eq.s32.totalorder %s29, 1
      %p199 = scmp.ne.s32.totalorder %s194, %s196
      %p200 = scmp.eq.s32.totalorder %s29, 0
      %p201 = por %p199, %p200
      %p202 = scmp.ne.s32.totalorder %s194, %s196
      %p203 = scmp.eq.s32.totalorder %s34, 1
      %p204 = por %p202, %p203
      %p205 = scmp.ne.s32.totalorder %s196, %s197
      %p206 = scmp.eq.s32.totalorder %s34, 0
      %p207 = por %p205, %p206
      %p208 = scmp.ne.s32.totalorder %s196, %s197
      %p209 = scmp.eq.s32.totalorder %s35, 1
      %p210 = por %p208, %p209
      %p212 = scmp.ne.s32.totalorder %s197, %s211
      %p213 = scmp.eq.s32.totalorder %s35, 0
      %p214 = por %p212, %p213
      %s216 = sadd.s32 %s215, 1
      %p219 = scmp.eq.s32.totalorder %s29, 1
      %p220 = scmp.ne.s32.totalorder %s215, %s217
      %p221 = scmp.eq.s32.totalorder %s29, 0
      %p222 = por %p220, %p221
      %p223 = scmp.ne.s32.totalorder %s215, %s217
      %p224 = scmp.eq.s32.totalorder %s34, 1
      %p225 = por %p223, %p224
      %p226 = scmp.ne.s32.totalorder %s217, %s218
      %p227 = scmp.eq.s32.totalorder %s34, 0
      %p228 = por %p226, %p227
      %p229 = scmp.ne.s32.totalorder %s217, %s218
      %p230 = scmp.eq.s32.totalorder %s35, 1
      %p231 = por %p229, %p230
      %p233 = scmp.ne.s32.totalorder %s218, %s232
      %p234 = scmp.eq.s32.totalorder %s35, 0
      %p235 = por %p233, %p234
      %s237 = sadd.s32 %s236, 1
      %p240 = scmp.eq.s32.totalorder %s29, 1
      %p241 = scmp.ne.s32.totalorder %s236, %s238
      %p242 = scmp.eq.s32.totalorder %s29, 0
      %p243 = por %p241, %p242
      %p244 = scmp.ne.s32.totalorder %s236, %s238
      %p245 = scmp.eq.s32.totalorder %s34, 1
      %p246 = por %p244, %p245
      %p247 = scmp.ne.s32.totalorder %s238, %s239
      %p248 = scmp.eq.s32.totalorder %s34, 0
      %p249 = por %p247, %p248
      %p250 = scmp.ne.s32.totalorder %s238, %s239
      %p251 = scmp.eq.s32.totalorder %s35, 1
      %p252 = por %p250, %p251
      %p254 = scmp.ne.s32.totalorder %s239, %s253
      %p255 = scmp.eq.s32.totalorder %s35, 0
      %p256 = por %p254, %p255
      %s258 = sadd.s32 %s257, 1
      %p261 = scmp.eq.s32.totalorder %s29, 1
      %p262 = scmp.ne.s32.totalorder %s257, %s259
      %p263 = scmp.eq.s32.totalorder %s29, 0
      %p264 = por %p262, %p263
      %p265 = scmp.ne.s32.totalorder %s257, %s259
      %p266 = scmp.eq.s32.totalorder %s34, 1
      %p267 = por %p265, %p266
      %p268 = scmp.ne.s32.totalorder %s259, %s260
      %p269 = scmp.eq.s32.totalorder %s34, 0
      %p270 = por %p268, %p269
      %p271 = scmp.ne.s32.totalorder %s259, %s260
      %p272 = scmp.eq.s32.totalorder %s35, 1
      %p273 = por %p271, %p272
      %p275 = scmp.ne.s32.totalorder %s260, %s274
      %p276 = scmp.eq.s32.totalorder %s35, 0
      %p277 = por %p275, %p276
      %s279 = sadd.s32 %s278, 1
      %p282 = scmp.eq.s32.totalorder %s29, 1
      %p283 = scmp.ne.s32.totalorder %s278, %s280
      %p284 = scmp.eq.s32.totalorder %s29, 0
      %p285 = por %p283, %p284
      %p286 = scmp.ne.s32.totalorder %s278, %s280
      %p287 = scmp.eq.s32.totalorder %s34, 1
      %p288 = por %p286, %p287
      %p289 = scmp.ne.s32.totalorder %s280, %s281
      %p290 = scmp.eq.s32.totalorder %s34, 0
      %p291 = por %p289, %p290
      %p292 = scmp.ne.s32.totalorder %s280, %s281
      %p293 = scmp.eq.s32.totalorder %s35, 1
      %p294 = por %p292, %p293
      %p296 = scmp.ne.s32.totalorder %s281, %s295
      %p297 = scmp.eq.s32.totalorder %s35, 0
      %p298 = por %p296, %p297
      %s300 = sadd.s32 %s299, 1
      %p303 = scmp.eq.s32.totalorder %s29, 1
      %p304 = scmp.ne.s32.totalorder %s299, %s301
      %p305 = scmp.eq.s32.totalorder %s29, 0
      %p306 = por %p304, %p305
      %p307 = scmp.ne.s32.totalorder %s299, %s301
      %p308 = scmp.eq.s32.totalorder %s34, 1
      %p309 = por %p307, %p308
      %p310 = scmp.ne.s32.totalorder %s301, %s302
      %p311 = scmp.eq.s32.totalorder %s34, 0
      %p312 = por %p310, %p311
      %p313 = scmp.ne.s32.totalorder %s301, %s302
      %p314 = scmp.eq.s32.totalorder %s35, 1
      %p315 = por %p313, %p314
      %p317 = scmp.ne.s32.totalorder %s302, %s316
      %p318 = scmp.eq.s32.totalorder %s35, 0
      %p319 = por %p317, %p318
      %s321 = sadd.s32 %s320, 1
      %p324 = scmp.eq.s32.totalorder %s29, 1
      %p325 = scmp.ne.s32.totalorder %s320, %s322
      %p326 = scmp.eq.s32.totalorder %s29, 0
      %p327 = por %p325, %p326
      %p328 = scmp.ne.s32.totalorder %s320, %s322
      %p329 = scmp.eq.s32.totalorder %s34, 1
      %p330 = por %p328, %p329
      %p331 = scmp.ne.s32.totalorder %s322, %s323
      %p332 = scmp.eq.s32.totalorder %s34, 0
      %p333 = por %p331, %p332
      %p334 = scmp.ne.s32.totalorder %s322, %s323
      %p335 = scmp.eq.s32.totalorder %s35, 1
      %p336 = por %p334, %p335
      %p338 = scmp.ne.s32.totalorder %s323, %s337
      %p339 = scmp.eq.s32.totalorder %s35, 0
      %p340 = por %p338, %p339
      %s342 = sadd.s32 %s341, 1
      %p345 = scmp.eq.s32.totalorder %s29, 1
      %p346 = scmp.ne.s32.totalorder %s341, %s343
      %p347 = scmp.eq.s32.totalorder %s29, 0
      %p348 = por %p346, %p347
      %p349 = scmp.ne.s32.totalorder %s341, %s343
      %p350 = scmp.eq.s32.totalorder %s34, 1
      %p351 = por %p349, %p350
      %p352 = scmp.ne.s32.totalorder %s343, %s344
      %p353 = scmp.eq.s32.totalorder %s34, 0
      %p354 = por %p352, %p353
      %p355 = scmp.ne.s32.totalorder %s343, %s344
      %p356 = scmp.eq.s32.totalorder %s35, 1
      %p357 = por %p355, %p356
      %p359 = scmp.ne.s32.totalorder %s344, %s358
      %p360 = scmp.eq.s32.totalorder %s35, 0
      %p361 = por %p359, %p360
      %s363 = sadd.s32 %s362, 1
      %p366 = scmp.eq.s32.totalorder %s29, 1
      %p367 = scmp.ne.s32.totalorder %s362, %s364
      %p368 = scmp.eq.s32.totalorder %s29, 0
      %p369 = por %p367, %p368
      %p370 = scmp.ne.s32.totalorder %s362, %s364
      %p371 = scmp.eq.s32.totalorder %s34, 1
      %p372 = por %p370, %p371
      %p373 = scmp.ne.s32.totalorder %s364, %s365
      %p374 = scmp.eq.s32.totalorder %s34, 0
      %p375 = por %p373, %p374
      %p376 = scmp.ne.s32.totalorder %s364, %s365
      %p377 = scmp.eq.s32.totalorder %s35, 1
      %p378 = por %p376, %p377
      %p380 = scmp.ne.s32.totalorder %s365, %s379
      %p381 = scmp.eq.s32.totalorder %s35, 0
      %p382 = por %p380, %p381
      %s384 = sadd.s32 %s383, 1
      %p387 = scmp.eq.s32.totalorder %s29, 1
      %p388 = scmp.ne.s32.totalorder %s383, %s385
      %p389 = scmp.eq.s32.totalorder %s29, 0
      %p390 = por %p388, %p389
      %p391 = scmp.ne.s32.totalorder %s383, %s385
      %p392 = scmp.eq.s32.totalorder %s34, 1
      %p393 = por %p391, %p392
      %p394 = scmp.ne.s32.totalorder %s385, %s386
      %p395 = scmp.eq.s32.totalorder %s34, 0
      %p396 = por %p394, %p395
      %p397 = scmp.ne.s32.totalorder %s385, %s386
      %p398 = scmp.eq.s32.totalorder %s35, 1
      %p399 = por %p397, %p398
      %p401 = scmp.ne.s32.totalorder %s386, %s400
      %p402 = scmp.eq.s32.totalorder %s35, 0
      %p403 = por %p401, %p402
      %s404 = ssub.s32 %s36, %s48
      %s405 = ssub.s32 %s37, %s44
      %s406 = sor.u32 %s404, %s405
      %p407 = scmp.eq.s32.totalorder %s406, 0
      %s409 = sadd.s32 %s408, 1
      %s410 = scalar_select %p407, %s408, %s409
      %p413 = pneg %p407
      %p414 = scmp.eq.s32.totalorder %s29, 1
      %p415 = por %p413, %p414
      %p416 = scmp.ne.s32.totalorder %s408, %s411
      %p417 = scmp.eq.s32.totalorder %s29, 0
      %p418 = por %p416, %p417
      %p419 = scmp.ne.s32.totalorder %s408, %s411
      %p420 = scmp.eq.s32.totalorder %s34, 1
      %p421 = por %p419, %p420
      %p422 = scmp.ne.s32.totalorder %s411, %s412
      %p423 = scmp.eq.s32.totalorder %s34, 0
      %p424 = por %p422, %p423
      %p425 = scmp.ne.s32.totalorder %s411, %s412
      %p426 = scmp.eq.s32.totalorder %s35, 1
      %p427 = por %p425, %p426
      %p429 = scmp.ne.s32.totalorder %s412, %s428
      %p430 = scmp.eq.s32.totalorder %s35, 0
      %p431 = por %p429, %p430
      %p432 = scmp.le.s32.totalorder 1, %s29
      %p433 = scmp.lt.s32.totalorder %s29, 3
      %p434 = pnand %p432, %p433
      %p435 = pneg %p434
      // Predicated region
      $region9: #{tpu_custom_call.1} parent=5 // pred_check
        _
      $region10: #{tpu_custom_call.1} parent=5 // pred_check_branch
        %437 = sbr.rel (%p434) target = $region12
      $region11: #{tpu_custom_call.1} parent=5 // pred_region
        %s438 = ssub.s32 %s29, 1
        // Predicated region
        $region13: #{tpu_custom_call.1} parent=11 // pred_check
          %p439 = pneg %p144
        $region14: #{tpu_custom_call.1} parent=11 // pred_check_branch
          %441 = sbr.rel (%p439) target = $region16
        $region15: #{tpu_custom_call.1} parent=11 // pred_region
          %s443 = ssub.s32 16, 16
          %444 = vsyncadd [#allocation3], %s443
          %s446 = sshll.u32 [#allocation2], 4
          %s447 = int_to_ptr.vmem [resolvable:$true] %s446
          %449 = dma.hbm_to_vmem [thread:$0]  %s3, 16, %s447, [#allocation3]
        $region16: #{tpu_custom_call.1} parent=11 // pred_fallthru
          _
        // Predicated region
        $region17: #{tpu_custom_call.1} parent=11 // pred_check
          %p450 = pneg %p165
        $region18: #{tpu_custom_call.1} parent=11 // pred_check_branch
          %452 = sbr.rel (%p450) target = $region20
        $region19: #{tpu_custom_call.1} parent=11 // pred_region
          %s454 = ssub.s32 16, 16
          %455 = vsyncadd [#allocation6], %s454
          %s457 = sshll.u32 [#allocation5], 4
          %s458 = int_to_ptr.vmem [resolvable:$true] %s457
          %460 = dma.hbm_to_vmem [thread:$0]  %s4, 16, %s458, [#allocation6]
        $region20: #{tpu_custom_call.1} parent=11 // pred_fallthru
          _
        // Predicated region
        $region21: #{tpu_custom_call.1} parent=11 // pred_check
          %p461 = pneg %p186
        $region22: #{tpu_custom_call.1} parent=11 // pred_check_branch
          %463 = sbr.rel (%p461) target = $region24
        $region23: #{tpu_custom_call.1} parent=11 // pred_region
          %s465 = ssub.s32 192, 192
          %466 = vsyncadd [#allocation6], %s465
          %s467 = sshll.u32 [#allocation7], 4
          %s468 = int_to_ptr.vmem [resolvable:$true] %s467
          %473 = dma.hbm_to_vmem [thread:$0]  %s5, 192, %s468, [#allocation6], 64, 64, 4
        $region24: #{tpu_custom_call.1} parent=11 // pred_fallthru
          _
        // Predicated region
        $region25: #{tpu_custom_call.1} parent=11 // pred_check
          %p474 = pneg %p207
        $region26: #{tpu_custom_call.1} parent=11 // pred_check_branch
          %476 = sbr.rel (%p474) target = $region28
        $region27: #{tpu_custom_call.1} parent=11 // pred_region
          %s478 = ssub.s32 64, 64
          %479 = vsyncadd [#allocation9], %s478
          %s481 = sshll.u32 [#allocation8], 4
          %s482 = int_to_ptr.vmem [resolvable:$true] %s481
          %484 = dma.hbm_to_vmem [thread:$0]  %s6, 64, %s482, [#allocation9]
        $region28: #{tpu_custom_call.1} parent=11 // pred_fallthru
          _
        // Predicated region
        $region29: #{tpu_custom_call.1} parent=11 // pred_check
          %p485 = pneg %p228
        $region30: #{tpu_custom_call.1} parent=11 // pred_check_branch
          %487 = sbr.rel (%p485) target = $region32
        $region31: #{tpu_custom_call.1} parent=11 // pred_region
          %s489 = ssub.s32 64, 64
          %490 = vsyncadd [#allocation9], %s489
          %s492 = sshll.u32 [#allocation10], 4
          %s493 = int_to_ptr.vmem [resolvable:$true] %s492
          %495 = dma.hbm_to_vmem [thread:$0]  %s7, 64, %s493, [#allocation9]
        $region32: #{tpu_custom_call.1} parent=11 // pred_fallthru
          _
        // Predicated region
        $region33: #{tpu_custom_call.1} parent=11 // pred_check
          %p496 = pneg %p249
        $region34: #{tpu_custom_call.1} parent=11 // pred_check_branch
          %498 = sbr.rel (%p496) target = $region36
        $region35: #{tpu_custom_call.1} parent=11 // pred_region
          %s500 = ssub.s32 16, 16
          %501 = vsyncadd [#allocation12], %s500
          %s503 = sshll.u32 [#allocation11], 4
          %s504 = int_to_ptr.vmem [resolvable:$true] %s503
          %506 = dma.hbm_to_vmem [thread:$0]  %s8, 16, %s504, [#allocation12]
        $region36: #{tpu_custom_call.1} parent=11 // pred_fallthru
          _
        // Predicated region
        $region37: #{tpu_custom_call.1} parent=11 // pred_check
          %p507 = pneg %p270
        $region38: #{tpu_custom_call.1} parent=11 // pred_check_branch
          %509 = sbr.rel (%p507) target = $region40
        $region39: #{tpu_custom_call.1} parent=11 // pred_region
          %s511 = ssub.s32 16, 16
          %512 = vsyncadd [#allocation12], %s511
          %s514 = sshll.u32 [#allocation13], 4
          %s515 = int_to_ptr.vmem [resolvable:$true] %s514
          %517 = dma.hbm_to_vmem [thread:$0]  %s9, 16, %s515, [#allocation12]
        $region40: #{tpu_custom_call.1} parent=11 // pred_fallthru
          _
        // Predicated region
        $region41: #{tpu_custom_call.1} parent=11 // pred_check
          %p518 = pneg %p291
        $region42: #{tpu_custom_call.1} parent=11 // pred_check_branch
          %520 = sbr.rel (%p518) target = $region44
        $region43: #{tpu_custom_call.1} parent=11 // pred_region
          _
        $region44: #{tpu_custom_call.1} parent=11 // pred_fallthru
          _
        // Predicated region
        $region45: #{tpu_custom_call.1} parent=11 // pred_check
          %p521 = pneg %p312
        $region46: #{tpu_custom_call.1} parent=11 // pred_check_branch
          %523 = sbr.rel (%p521) target = $region48
        $region47: #{tpu_custom_call.1} parent=11 // pred_region
          _
        $region48: #{tpu_custom_call.1} parent=11 // pred_fallthru
          _
        // Predicated region
        $region49: #{tpu_custom_call.1} parent=11 // pred_check
          %p524 = pneg %p333
        $region50: #{tpu_custom_call.1} parent=11 // pred_check_branch
          %526 = sbr.rel (%p524) target = $region52
        $region51: #{tpu_custom_call.1} parent=11 // pred_region
          _
        $region52: #{tpu_custom_call.1} parent=11 // pred_fallthru
          _
        // Predicated region
        $region53: #{tpu_custom_call.1} parent=11 // pred_check
          %p527 = pneg %p354
        $region54: #{tpu_custom_call.1} parent=11 // pred_check_branch
          %529 = sbr.rel (%p527) target = $region56
        $region55: #{tpu_custom_call.1} parent=11 // pred_region
          _
        $region56: #{tpu_custom_call.1} parent=11 // pred_fallthru
          _
        // Predicated region
        $region57: #{tpu_custom_call.1} parent=11 // pred_check
          %p530 = pneg %p375
        $region58: #{tpu_custom_call.1} parent=11 // pred_check_branch
          %532 = sbr.rel (%p530) target = $region60
        $region59: #{tpu_custom_call.1} parent=11 // pred_region
          _
        $region60: #{tpu_custom_call.1} parent=11 // pred_fallthru
          _
        // Predicated region
        $region61: #{tpu_custom_call.1} parent=11 // pred_check
          %p533 = pneg %p396
        $region62: #{tpu_custom_call.1} parent=11 // pred_check_branch
          %535 = sbr.rel (%p533) target = $region64
        $region63: #{tpu_custom_call.1} parent=11 // pred_region
          _
        $region64: #{tpu_custom_call.1} parent=11 // pred_fallthru
          _
      $region12: #{tpu_custom_call.1} parent=5 // pred_fallthru
        _
      %p536 = scmp.lt.s32.totalorder %s29, 2
      // Predicated region
      $region65: #{tpu_custom_call.1} parent=5 // pred_check
        %p537 = pneg %p536
      $region66: #{tpu_custom_call.1} parent=5 // pred_check_branch
        %539 = sbr.rel (%p537) target = $region68
      $region67: #{tpu_custom_call.1} parent=5 // pred_region
        // Predicated region
        $region69: #{tpu_custom_call.1} parent=67 // pred_check
          %p540 = pneg %p61
        $region70: #{tpu_custom_call.1} parent=67 // pred_check_branch
          %542 = sbr.rel (%p540) target = $region72
        $region71: #{tpu_custom_call.1} parent=67 // pred_region
          %p543 = scmp.lt.s32.totalorder %s36, 1
          %s544 = scalar_select %p543, %s36, 1
          %s545 = smul.addr %s544, 2
          %s546 = smul.addr %s545, 8
          %s547 = scalar_lea.vmem %s0, %s546
        $region72: #{tpu_custom_call.1} parent=67 // pred_fallthru
          _
        // Predicated region
        $region73: #{tpu_custom_call.1} parent=67 // pred_check
          %p548 = pneg %p89
        $region74: #{tpu_custom_call.1} parent=67 // pred_check_branch
          %550 = sbr.rel (%p548) target = $region76
        $region75: #{tpu_custom_call.1} parent=67 // pred_region
          %s551 = smul.u32 2, %s37
          %p552 = scmp.lt.s32.totalorder %s36, 1
          %s553 = scalar_select %p552, %s36, 1
          %p554 = scmp.lt.s32.totalorder %s551, 1
          %s555 = scalar_select %p554, %s551, 1
          %s556 = smul.addr %s553, 2
          %s557 = sadd.s32 %s555, %s556
          %s558 = smul.addr %s557, 8
          %s559 = scalar_lea.vmem %s1, %s558
          %s560 = smul.u32 2, %s37
        $region76: #{tpu_custom_call.1} parent=67 // pred_fallthru
          _
        // Predicated region
        $region77: #{tpu_custom_call.1} parent=67 // pred_check
          %p561 = pneg %p117
        $region78: #{tpu_custom_call.1} parent=67 // pred_check_branch
          %563 = sbr.rel (%p561) target = $region80
        $region79: #{tpu_custom_call.1} parent=67 // pred_region
          %s564 = smul.u32 2, %s37
          %p565 = scmp.lt.s32.totalorder %s36, 1
          %s566 = scalar_select %p565, %s36, 1
          %p567 = scmp.lt.s32.totalorder %s564, 1
          %s568 = scalar_select %p567, %s564, 1
          %s569 = smul.addr %s566, 2
          %s570 = sadd.s32 %s568, %s569
          %s571 = smul.addr %s570, 8
          %s572 = scalar_lea.vmem %s2, %s571
          %s573 = smul.u32 2, %s37
        $region80: #{tpu_custom_call.1} parent=67 // pred_fallthru
          _
      $region68: #{tpu_custom_call.1} parent=5 // pred_fallthru
        _
      %p574 = scmp.le.s32.totalorder 1, %s29
      %p575 = scmp.lt.s32.totalorder %s29, 3
      %p576 = pnand %p574, %p575
      %p577 = pneg %p576
      // Predicated region
      $region81: #{tpu_custom_call.1} parent=5 // pred_check
        _
      $region82: #{tpu_custom_call.1} parent=5 // pred_check_branch
        %579 = sbr.rel (%p576) target = $region84
      $region83: #{tpu_custom_call.1} parent=5 // pred_region
        %s580 = ssub.s32 %s29, 1
        // Predicated region
        $region85: #{tpu_custom_call.1} parent=83 // pred_check
          %p581 = pneg %p144
        $region86: #{tpu_custom_call.1} parent=83 // pred_check_branch
          %583 = sbr.rel (%p581) target = $region88
        $region87: #{tpu_custom_call.1} parent=83 // pred_region
          %584 = dma.done [#allocation3], 16
        $region88: #{tpu_custom_call.1} parent=83 // pred_fallthru
          _
        // Predicated region
        $region89: #{tpu_custom_call.1} parent=83 // pred_check
          %p585 = pneg %p165
        $region90: #{tpu_custom_call.1} parent=83 // pred_check_branch
          %587 = sbr.rel (%p585) target = $region92
        $region91: #{tpu_custom_call.1} parent=83 // pred_region
          %588 = dma.done [#allocation6], 16
        $region92: #{tpu_custom_call.1} parent=83 // pred_fallthru
          _
        // Predicated region
        $region93: #{tpu_custom_call.1} parent=83 // pred_check
          %p589 = pneg %p186
        $region94: #{tpu_custom_call.1} parent=83 // pred_check_branch
          %591 = sbr.rel (%p589) target = $region96
        $region95: #{tpu_custom_call.1} parent=83 // pred_region
          %592 = dma.done [#allocation6], 192
        $region96: #{tpu_custom_call.1} parent=83 // pred_fallthru
          _
        // Predicated region
        $region97: #{tpu_custom_call.1} parent=83 // pred_check
          %p593 = pneg %p207
        $region98: #{tpu_custom_call.1} parent=83 // pred_check_branch
          %595 = sbr.rel (%p593) target = $region100
        $region99: #{tpu_custom_call.1} parent=83 // pred_region
          %596 = dma.done [#allocation9], 64
        $region100: #{tpu_custom_call.1} parent=83 // pred_fallthru
          _
        // Predicated region
        $region101: #{tpu_custom_call.1} parent=83 // pred_check
          %p597 = pneg %p228
        $region102: #{tpu_custom_call.1} parent=83 // pred_check_branch
          %599 = sbr.rel (%p597) target = $region104
        $region103: #{tpu_custom_call.1} parent=83 // pred_region
          %600 = dma.done [#allocation9], 64
        $region104: #{tpu_custom_call.1} parent=83 // pred_fallthru
          _
        // Predicated region
        $region105: #{tpu_custom_call.1} parent=83 // pred_check
          %p601 = pneg %p249
        $region106: #{tpu_custom_call.1} parent=83 // pred_check_branch
          %603 = sbr.rel (%p601) target = $region108
        $region107: #{tpu_custom_call.1} parent=83 // pred_region
          %604 = dma.done [#allocation12], 16
        $region108: #{tpu_custom_call.1} parent=83 // pred_fallthru
          _
        // Predicated region
        $region109: #{tpu_custom_call.1} parent=83 // pred_check
          %p605 = pneg %p270
        $region110: #{tpu_custom_call.1} parent=83 // pred_check_branch
          %607 = sbr.rel (%p605) target = $region112
        $region111: #{tpu_custom_call.1} parent=83 // pred_region
          %608 = dma.done [#allocation12], 16
        $region112: #{tpu_custom_call.1} parent=83 // pred_fallthru
          _
        %p609 = scmp.lt.s32.totalorder %s38, 1
        %s610 = scalar_select %p609, %s38, 1
        %s611 = smul.addr %s610, 2
        %s612 = smul.addr %s611, 8
        %s613 = scalar_lea.vmem %s0, %s612
        %p614 = pneg %p67
        %p615 = pneg %p64
        %s616 = smul.u32 2, %s39
        %p617 = scmp.lt.s32.totalorder %s38, 1
        %s618 = scalar_select %p617, %s38, 1
        %p619 = scmp.lt.s32.totalorder %s616, 1
        %s620 = scalar_select %p619, %s616, 1
        %s621 = smul.addr %s618, 2
        %s622 = sadd.s32 %s620, %s621
        %s623 = smul.addr %s622, 8
        %s624 = scalar_lea.vmem %s1, %s623
        %p625 = pneg %p95
        %p626 = pneg %p92
        %s627 = smul.u32 2, %s39
        %p628 = scmp.lt.s32.totalorder %s38, 1
        %s629 = scalar_select %p628, %s38, 1
        %p630 = scmp.lt.s32.totalorder %s627, 1
        %s631 = scalar_select %p630, %s627, 1
        %s632 = smul.addr %s629, 2
        %s633 = sadd.s32 %s631, %s632
        %s634 = smul.addr %s633, 8
        %s635 = scalar_lea.vmem %s2, %s634
        %p636 = pneg %p123
        %p637 = pneg %p120
        %p638 = pneg %p144
        %p639 = pneg %p141
        %p640 = pneg %p165
        %p641 = pneg %p162
        %p642 = pneg %p186
        %p643 = pneg %p183
        %p644 = pneg %p207
        %p645 = pneg %p204
        %p646 = pneg %p228
        %p647 = pneg %p225
        %p648 = pneg %p249
        %p649 = pneg %p246
        %p650 = pneg %p270
        %p651 = pneg %p267
        %p652 = pneg %p291
        %p653 = pneg %p288
        %p654 = pneg %p312
        %p655 = pneg %p309
        %p656 = pneg %p333
        %p657 = pneg %p330
        %p658 = pneg %p354
        %p659 = pneg %p351
        %p660 = pneg %p375
        %p661 = pneg %p372
        %p662 = pneg %p396
        %p663 = pneg %p393
        %p664 = pneg %p424
        %p665 = pneg %p421
        %s666 = sand.u32 %s411, 1
        %s667 = scalar_lea.sflag [#allocation4], %s666
        %s668 = sand.u32 %s411, 1
        %s669 = smul.addr %s668, 16
        %s670 = scalar_lea.vmem [#allocation14], %s669
        %p671 = scmp.lt.s32.totalorder %s38, 1
        %s672 = scalar_select %p671, %s38, 1
        %s673 = smul.addr %s672, 2
        %s674 = smul.addr %s673, 8
        %s675 = scalar_lea.vmem %s0, %s674
        %s676 = smul.u32 2, %s39
        %p677 = scmp.lt.s32.totalorder %s38, 1
        %s678 = scalar_select %p677, %s38, 1
        %p679 = scmp.lt.s32.totalorder %s676, 1
        %s680 = scalar_select %p679, %s676, 1
        %s681 = smul.addr %s678, 2
        %s682 = sadd.s32 %s680, %s681
        %s683 = smul.addr %s682, 8
        %s684 = scalar_lea.vmem %s1, %s683
        %s685 = smul.u32 2, %s39
        %s686 = smul.u32 2, %s39
        %p687 = scmp.lt.s32.totalorder %s38, 1
        %s688 = scalar_select %p687, %s38, 1
        %p689 = scmp.lt.s32.totalorder %s686, 1
        %s690 = scalar_select %p689, %s686, 1
        %s691 = smul.addr %s688, 2
        %s692 = sadd.s32 %s690, %s691
        %s693 = smul.addr %s692, 8
        %s694 = scalar_lea.vmem %s2, %s693
        %s695 = smul.u32 2, %s39
        %s696 = smul.u32 2, %s39
        %v697 = vld [vmem:[%s675] sm:$0xff]
        %v698 = vld [vmem:[%s675 + $0x8] sm:$0xff]
        %v699 = vld [vmem:[%s684] sm:$0xff]
        %v700 = vld [vmem:[%s684 + $0x8] sm:$0xff]
        %v701 = vld [vmem:[#allocation2] sm:$0x1]
        %v702 = vld [vmem:[#allocation5] sm:$0x1]
        %704 = vset.pattern.permute.xlu0 0
        %705 = vperm.xlu0 %704, %v697
        %v706 = vpop.permute.xlu0 %705
        %709 = vset.pattern.permute.xlu0 0
        %710 = vperm.xlu0 %709, %v698
        %v711 = vpop.permute.xlu0 %710
        %v714 = vlaneseq
        %v715 = vshrl.u32 %v714, 7
        %v716 = vsub.s32 0, %v715
        %v717 = vrot.slane %v701, %v716
        %v719 = vmul.f32 %v706, %v717
        %v720 = vmul.f32 %v711, %v717
        %v722 = vlaneseq
        %v723 = vshrl.u32 %v722, 7
        %v724 = vsub.s32 0, %v723
        %v725 = vrot.slane %v702, %v724
        %v727 = vadd.f32 %v719, %v725
        %v728 = vadd.f32 %v720, %v725
        %730 = vset.pattern.permute.xlu0 0
        %731 = vperm.xlu0 %730, %v699
        %v732 = vpop.permute.xlu0 %731
        %735 = vset.pattern.permute.xlu0 0
        %736 = vperm.xlu0 %735, %v700
        %v737 = vpop.permute.xlu0 %736
        %v739 = vmul.f32 %v732, %v717
        %v740 = vmul.f32 %v737, %v717
        %v741 = vadd.f32 %v739, %v725
        %v742 = vadd.f32 %v740, %v725
        %v743 = vld [vmem:[#allocation7] sm:$0xf]
        %v744 = vld [vmem:[#allocation7 + $0x4] sm:$0xf]
        %v745 = vld [vmem:[#allocation7 + $0x8] sm:$0xf]
        %v746 = vld [vmem:[#allocation8] sm:$0x7]
        %v747 = vlaneseq
        %v748 = vshrl.u32 %v747, 7
        %v749 = vsub.s32 0, %v748
        %v750 = vrot.slane %v746, %v749
        %vm751 = vcmask 31744
        %v753 = vsel %vm751, %v741, 0
        %v756 = vsel %vm751, %v742, 0
        %vm758 = vcmask 1043456
        %v760 = vsel %vm758, %v743, 0
        %762 = vmatprep.subr.mxu0 0.0
        %763 = vmatpush1.msra.mxu0 %v760
        %764 = vmatprep.subr.mxu0 0.0
        %765 = vmatpush1.msra.mxu0 0.0
        %766 = vmatprep.subr.mxu0 0.0
        %767 = vmatpush1.msra.mxu0 0.0
        %768 = vmatprep.subr.mxu0 0.0
        %769 = vmatpush1.msra.mxu0 0.0
        %770 = vmatprep.subr.mxu0 0.0
        %771 = vmatpush1.msra.mxu0 0.0
        %772 = vmatprep.subr.mxu0 0.0
        %773 = vmatpush1.msra.mxu0 0.0
        %774 = vmatprep.subr.mxu0 0.0
        %775 = vmatpush1.msra.mxu0 0.0
        %776 = vmatprep.subr.mxu0 0.0
        %777 = vmatpush1.msra.mxu0 0.0
        %778 = vmatprep.subr.mxu0 0.0
        %779 = vmatpush1.msra.mxu0 0.0
        %780 = vmatprep.subr.mxu0 0.0
        %781 = vmatpush1.msra.mxu0 0.0
        %782 = vmatprep.subr.mxu0 0.0
        %783 = vmatpush1.msra.mxu0 0.0
        %784 = vmatprep.subr.mxu0 0.0
        %785 = vmatpush1.msra.mxu0 0.0
        %786 = vmatprep.subr.mxu0 0.0
        %787 = vmatpush1.msra.mxu0 0.0
        %788 = vmatprep.subr.mxu0 0.0
        %789 = vmatpush1.msra.mxu0 0.0
        %790 = vmatprep.subr.mxu0 0.0
        %791 = vmatpush1.msra.mxu0 0.0
        %792 = vmatprep.subr.mxu0 0.0
        %793 = vmatpush1.msra.mxu0 0.0
        %794 = vmatprep.subr.mxu0 0.0
        %795 = vmatpush1.msra.mxu0 0.0
        %796 = vmatprep.subr.mxu0 0.0
        %797 = vmatpush1.msra.mxu0 0.0
        %798 = vmatprep.subr.mxu0 0.0
        %799 = vmatpush1.msra.mxu0 0.0
        %800 = vmatprep.subr.mxu0 0.0
        %801 = vmatpush1.msra.mxu0 0.0
        %802 = vmatprep.subr.mxu0 0.0
        %803 = vmatpush1.msra.mxu0 0.0
        %804 = vmatprep.subr.mxu0 0.0
        %805 = vmatpush1.msra.mxu0 0.0
        %806 = vmatprep.subr.mxu0 0.0
        %807 = vmatpush1.msra.mxu0 0.0
        %808 = vmatprep.subr.mxu0 0.0
        %809 = vmatpush1.msra.mxu0 0.0
        %810 = vmatprep.subr.mxu0 0.0
        %811 = vmatpush1.msra.mxu0 0.0
        %812 = vmatprep.subr.mxu0 0.0
        %813 = vmatpush1.msra.mxu0 0.0
        %814 = vmatprep.subr.mxu0 0.0
        %815 = vmatpush1.msra.mxu0 0.0
        %816 = vmatprep.subr.mxu0 0.0
        %817 = vmatpush1.msra.mxu0 0.0
        %818 = vmatprep.subr.mxu0 0.0
        %819 = vmatpush1.msra.mxu0 0.0
        %820 = vmatprep.subr.mxu0 0.0
        %821 = vmatpush1.msra.mxu0 0.0
        %822 = vmatprep.subr.mxu0 0.0
        %823 = vmatpush1.msra.mxu0 0.0
        %824 = vmatprep.subr.mxu0 0.0
        %825 = vmatpush1.msra.mxu0 0.0
        %826 = vmatprep.mubr.f32.mxu0 0.0
        %827 = vmatmul.mubr.f32.gmra.mrb[0].mxu0 %v753
        %v828 = vpop.f32.mrb[0].mxu0
        %v829 = vadd.f32 %v750, %v828
        %v830 = vpop.f32.mrb[0].mxu0
        %831 = vmatprep.mubr.f32.mxu0 0.0
        %832 = vmatmul.mubr.f32.gmra.mrb[0].mxu0 %v756
        %v833 = vpop.f32.mrb[0].mxu0
        %v834 = vadd.f32 %v750, %v833
        %v835 = vpop.f32.mrb[0].mxu0
        %836 = vdwg.mxu0
        %v837 = vlaneseq
        %v838 = vshrl.u32 %v837, 7
        %v839 = vsub.s32 1, %v838
        %v840 = vrot.slane %v746, %v839
        %v842 = vsel %vm751, %v727, 0
        %v845 = vsel %vm751, %v728, 0
        %v848 = vsel %vm758, %v744, 0
        %850 = vmatprep.subr.mxu0 0.0
        %851 = vmatpush1.msra.mxu0 %v848
        %852 = vmatprep.subr.mxu0 0.0
        %853 = vmatpush1.msra.mxu0 0.0
        %854 = vmatprep.subr.mxu0 0.0
        %855 = vmatpush1.msra.mxu0 0.0
        %856 = vmatprep.subr.mxu0 0.0
        %857 = vmatpush1.msra.mxu0 0.0
        %858 = vmatprep.subr.mxu0 0.0
        %859 = vmatpush1.msra.mxu0 0.0
        %860 = vmatprep.subr.mxu0 0.0
        %861 = vmatpush1.msra.mxu0 0.0
        %862 = vmatprep.subr.mxu0 0.0
        %863 = vmatpush1.msra.mxu0 0.0
        %864 = vmatprep.subr.mxu0 0.0
        %865 = vmatpush1.msra.mxu0 0.0
        %866 = vmatprep.subr.mxu0 0.0
        %867 = vmatpush1.msra.mxu0 0.0
        %868 = vmatprep.subr.mxu0 0.0
        %869 = vmatpush1.msra.mxu0 0.0
        %870 = vmatprep.subr.mxu0 0.0
        %871 = vmatpush1.msra.mxu0 0.0
        %872 = vmatprep.subr.mxu0 0.0
        %873 = vmatpush1.msra.mxu0 0.0
        %874 = vmatprep.subr.mxu0 0.0
        %875 = vmatpush1.msra.mxu0 0.0
        %876 = vmatprep.subr.mxu0 0.0
        %877 = vmatpush1.msra.mxu0 0.0
        %878 = vmatprep.subr.mxu0 0.0
        %879 = vmatpush1.msra.mxu0 0.0
        %880 = vmatprep.subr.mxu0 0.0
        %881 = vmatpush1.msra.mxu0 0.0
        %882 = vmatprep.subr.mxu0 0.0
        %883 = vmatpush1.msra.mxu0 0.0
        %884 = vmatprep.subr.mxu0 0.0
        %885 = vmatpush1.msra.mxu0 0.0
        %886 = vmatprep.subr.mxu0 0.0
        %887 = vmatpush1.msra.mxu0 0.0
        %888 = vmatprep.subr.mxu0 0.0
        %889 = vmatpush1.msra.mxu0 0.0
        %890 = vmatprep.subr.mxu0 0.0
        %891 = vmatpush1.msra.mxu0 0.0
        %892 = vmatprep.subr.mxu0 0.0
        %893 = vmatpush1.msra.mxu0 0.0
        %894 = vmatprep.subr.mxu0 0.0
        %895 = vmatpush1.msra.mxu0 0.0
        %896 = vmatprep.subr.mxu0 0.0
        %897 = vmatpush1.msra.mxu0 0.0
        %898 = vmatprep.subr.mxu0 0.0
        %899 = vmatpush1.msra.mxu0 0.0
        %900 = vmatprep.subr.mxu0 0.0
        %901 = vmatpush1.msra.mxu0 0.0
        %902 = vmatprep.subr.mxu0 0.0
        %903 = vmatpush1.msra.mxu0 0.0
        %904 = vmatprep.subr.mxu0 0.0
        %905 = vmatpush1.msra.mxu0 0.0
        %906 = vmatprep.subr.mxu0 0.0
        %907 = vmatpush1.msra.mxu0 0.0
        %908 = vmatprep.subr.mxu0 0.0
        %909 = vmatpush1.msra.mxu0 0.0
        %910 = vmatprep.subr.mxu0 0.0
        %911 = vmatpush1.msra.mxu0 0.0
        %912 = vmatprep.subr.mxu0 0.0
        %913 = vmatpush1.msra.mxu0 0.0
        %914 = vmatprep.mubr.f32.mxu0 0.0
        %915 = vmatmul.mubr.f32.gmra.mrb[0].mxu0 %v842
        %v916 = vpop.f32.mrb[0].mxu0
        %v917 = vadd.f32 %v840, %v916
        %v918 = vpop.f32.mrb[0].mxu0
        %919 = vmatprep.mubr.f32.mxu0 0.0
        %920 = vmatmul.mubr.f32.gmra.mrb[0].mxu0 %v845
        %v921 = vpop.f32.mrb[0].mxu0
        %v922 = vadd.f32 %v840, %v921
        %v923 = vpop.f32.mrb[0].mxu0
        %924 = vdwg.mxu0
        %v925 = vlaneseq
        %v926 = vshrl.u32 %v925, 7
        %v927 = vsub.s32 2, %v926
        %v928 = vrot.slane %v746, %v927
        %v930 = vsel %vm758, %v745, 0
        %932 = vmatprep.subr.mxu0 0.0
        %933 = vmatpush1.msra.mxu0 %v930
        %934 = vmatprep.subr.mxu0 0.0
        %935 = vmatpush1.msra.mxu0 0.0
        %936 = vmatprep.subr.mxu0 0.0
        %937 = vmatpush1.msra.mxu0 0.0
        %938 = vmatprep.subr.mxu0 0.0
        %939 = vmatpush1.msra.mxu0 0.0
        %940 = vmatprep.subr.mxu0 0.0
        %941 = vmatpush1.msra.mxu0 0.0
        %942 = vmatprep.subr.mxu0 0.0
        %943 = vmatpush1.msra.mxu0 0.0
        %944 = vmatprep.subr.mxu0 0.0
        %945 = vmatpush1.msra.mxu0 0.0
        %946 = vmatprep.subr.mxu0 0.0
        %947 = vmatpush1.msra.mxu0 0.0
        %948 = vmatprep.subr.mxu0 0.0
        %949 = vmatpush1.msra.mxu0 0.0
        %950 = vmatprep.subr.mxu0 0.0
        %951 = vmatpush1.msra.mxu0 0.0
        %952 = vmatprep.subr.mxu0 0.0
        %953 = vmatpush1.msra.mxu0 0.0
        %954 = vmatprep.subr.mxu0 0.0
        %955 = vmatpush1.msra.mxu0 0.0
        %956 = vmatprep.subr.mxu0 0.0
        %957 = vmatpush1.msra.mxu0 0.0
        %958 = vmatprep.subr.mxu0 0.0
        %959 = vmatpush1.msra.mxu0 0.0
        %960 = vmatprep.subr.mxu0 0.0
        %961 = vmatpush1.msra.mxu0 0.0
        %962 = vmatprep.subr.mxu0 0.0
        %963 = vmatpush1.msra.mxu0 0.0
        %964 = vmatprep.subr.mxu0 0.0
        %965 = vmatpush1.msra.mxu0 0.0
        %966 = vmatprep.subr.mxu0 0.0
        %967 = vmatpush1.msra.mxu0 0.0
        %968 = vmatprep.subr.mxu0 0.0
        %969 = vmatpush1.msra.mxu0 0.0
        %970 = vmatprep.subr.mxu0 0.0
        %971 = vmatpush1.msra.mxu0 0.0
        %972 = vmatprep.subr.mxu0 0.0
        %973 = vmatpush1.msra.mxu0 0.0
        %974 = vmatprep.subr.mxu0 0.0
        %975 = vmatpush1.msra.mxu0 0.0
        %976 = vmatprep.subr.mxu0 0.0
        %977 = vmatpush1.msra.mxu0 0.0
        %978 = vmatprep.subr.mxu0 0.0
        %979 = vmatpush1.msra.mxu0 0.0
        %980 = vmatprep.subr.mxu0 0.0
        %981 = vmatpush1.msra.mxu0 0.0
        %982 = vmatprep.subr.mxu0 0.0
        %983 = vmatpush1.msra.mxu0 0.0
        %984 = vmatprep.subr.mxu0 0.0
        %985 = vmatpush1.msra.mxu0 0.0
        %986 = vmatprep.subr.mxu0 0.0
        %987 = vmatpush1.msra.mxu0 0.0
        %988 = vmatprep.subr.mxu0 0.0
        %989 = vmatpush1.msra.mxu0 0.0
        %990 = vmatprep.subr.mxu0 0.0
        %991 = vmatpush1.msra.mxu0 0.0
        %992 = vmatprep.subr.mxu0 0.0
        %993 = vmatpush1.msra.mxu0 0.0
        %994 = vmatprep.subr.mxu0 0.0
        %995 = vmatpush1.msra.mxu0 0.0
        %996 = vmatprep.mubr.f32.mxu0 0.0
        %997 = vmatmul.mubr.f32.gmra.mrb[0].mxu0 %v842
        %v998 = vpop.f32.mrb[0].mxu0
        %v999 = vadd.f32 %v928, %v998
        %v1000 = vpop.f32.mrb[0].mxu0
        %1001 = vmatprep.mubr.f32.mxu0 0.0
        %1002 = vmatmul.mubr.f32.gmra.mrb[0].mxu0 %v845
        %v1003 = vpop.f32.mrb[0].mxu0
        %v1004 = vadd.f32 %v928, %v1003
        %v1005 = vpop.f32.mrb[0].mxu0
        %1006 = vdwg.mxu0
        %v1007 = vlaneseq
        %v1008 = vand.u32 %v1007, 127
        %vm1009 = vcmp.ge.s32.totalorder %v1008, 0
        %vm1010 = vcmp.lt.s32.totalorder %v1008, 2
        %vm1011 = vmand %vm1009, %vm1010
        %v1012 = vsel %vm1011, 1, 0
        %v1013 = vcvt.s32.f32 %v1012
        %v1014 = vmul.f32 %v1013, 0.70710677
        %v1015 = vmul.f32 %v829, %v1014
        %v1016 = vmul.f32 %v834, %v1014
        %v1017 = vmul.f32 %v999, %v1013
        %v1018 = vmul.f32 %v1004, %v1013
        %v1020 = vsel %vm751, %v1015, 0
        %v1023 = vsel %vm751, %v1016, 0
        %v1026 = vsel %vm751, %v917, 0
        %v1029 = vsel %vm751, %v922, 0
        %1031 = vmatprep.subr.mxu0 0.0
        %1032 = vmatpush1.xpose.msra.mxu0 %v1026
        %1033 = vmatprep.subr.mxu0 0.0
        %1034 = vmatpush1.xpose.msra.mxu0 %v1029
        %1035 = vmatprep.subr.mxu0 0.0
        %1036 = vmatpush1.xpose.msra.mxu0 0.0
        %1037 = vmatprep.subr.mxu0 0.0
        %1038 = vmatpush1.xpose.msra.mxu0 0.0
        %1039 = vmatprep.subr.mxu0 0.0
        %1040 = vmatpush1.xpose.msra.mxu0 0.0
        %1041 = vmatprep.subr.mxu0 0.0
        %1042 = vmatpush1.xpose.msra.mxu0 0.0
        %1043 = vmatprep.subr.mxu0 0.0
        %1044 = vmatpush1.xpose.msra.mxu0 0.0
        %1045 = vmatprep.subr.mxu0 0.0
        %1046 = vmatpush1.xpose.msra.mxu0 0.0
        %1047 = vmatprep.subr.mxu0 0.0
        %1048 = vmatpush1.xpose.msra.mxu0 0.0
        %1049 = vmatprep.subr.mxu0 0.0
        %1050 = vmatpush1.xpose.msra.mxu0 0.0
        %1051 = vmatprep.subr.mxu0 0.0
        %1052 = vmatpush1.xpose.msra.mxu0 0.0
        %1053 = vmatprep.subr.mxu0 0.0
        %1054 = vmatpush1.xpose.msra.mxu0 0.0
        %1055 = vmatprep.subr.mxu0 0.0
        %1056 = vmatpush1.xpose.msra.mxu0 0.0
        %1057 = vmatprep.subr.mxu0 0.0
        %1058 = vmatpush1.xpose.msra.mxu0 0.0
        %1059 = vmatprep.subr.mxu0 0.0
        %1060 = vmatpush1.xpose.msra.mxu0 0.0
        %1061 = vmatprep.subr.mxu0 0.0
        %1062 = vmatpush1.xpose.msra.mxu0 0.0
        %1063 = vmatprep.subr.mxu0 0.0
        %1064 = vmatpush1.xpose.msra.mxu0 0.0
        %1065 = vmatprep.subr.mxu0 0.0
        %1066 = vmatpush1.xpose.msra.mxu0 0.0
        %1067 = vmatprep.subr.mxu0 0.0
        %1068 = vmatpush1.xpose.msra.mxu0 0.0
        %1069 = vmatprep.subr.mxu0 0.0
        %1070 = vmatpush1.xpose.msra.mxu0 0.0
        %1071 = vmatprep.subr.mxu0 0.0
        %1072 = vmatpush1.xpose.msra.mxu0 0.0
        %1073 = vmatprep.subr.mxu0 0.0
        %1074 = vmatpush1.xpose.msra.mxu0 0.0
        %1075 = vmatprep.subr.mxu0 0.0
        %1076 = vmatpush1.xpose.msra.mxu0 0.0
        %1077 = vmatprep.subr.mxu0 0.0
        %1078 = vmatpush1.xpose.msra.mxu0 0.0
        %1079 = vmatprep.subr.mxu0 0.0
        %1080 = vmatpush1.xpose.msra.mxu0 0.0
        %1081 = vmatprep.subr.mxu0 0.0
        %1082 = vmatpush1.xpose.msra.mxu0 0.0
        %1083 = vmatprep.subr.mxu0 0.0
        %1084 = vmatpush1.xpose.msra.mxu0 0.0
        %1085 = vmatprep.subr.mxu0 0.0
        %1086 = vmatpush1.xpose.msra.mxu0 0.0
        %1087 = vmatprep.subr.mxu0 0.0
        %1088 = vmatpush1.xpose.msra.mxu0 0.0
        %1089 = vmatprep.subr.mxu0 0.0
        %1090 = vmatpush1.xpose.msra.mxu0 0.0
        %1091 = vmatprep.subr.mxu0 0.0
        %1092 = vmatpush1.xpose.msra.mxu0 0.0
        %1093 = vmatprep.subr.mxu0 0.0
        %1094 = vmatpush1.xpose.msra.mxu0 0.0
        %1095 = vmatprep.mubr.f32.mxu0 0.0
        %1096 = vmatmul.mubr.f32.gmra.mrb[0].mxu0 %v1020
        %v1097 = vpop.f32.mrb[0].mxu0
        %v1098 = vadd.f32 0.0, %v1097
        %v1099 = vpop.f32.mrb[0].mxu0
        %1100 = vmatprep.mubr.f32.mxu0 0.0
        %1101 = vmatmul.mubr.f32.gmra.mrb[0].mxu0 %v1023
        %v1102 = vpop.f32.mrb[0].mxu0
        %v1103 = vadd.f32 0.0, %v1102
        %v1104 = vpop.f32.mrb[0].mxu0
        %1105 = vdwg.mxu0
        %vm1106 = vcmask 130048
        %v1107 = vsel %vm1106, %v1098, -inf
        %1108 = vmax.xlane.f32.xlu0 %v1107
        %v1109 = vpop.xlane.xlu0 %1108
        %v1110 = vsel %vm1106, %v1103, -inf
        %1111 = vmax.xlane.f32.xlu0 %v1110
        %v1112 = vpop.xlane.xlu0 %1111
        %v1113 = vsub.f32 %v1098, %v1109
        %v1114 = vsub.f32 %v1103, %v1112
        %v1115 = vmul.f32 %v1113, 1.442695
        %v1116 = vpow.pop %v1115
        %v1117 = vmul.f32 %v1114, 1.442695
        %v1118 = vpow.pop %v1117
        %v1119 = vsel %vm1106, %v1116, 0.0
        %1120 = vadd.xlane.f32.xlu0 %v1119
        %v1121 = vpop.xlane.xlu0 %1120
        %v1122 = vsel %vm1106, %v1118, 0.0
        %1123 = vadd.xlane.f32.xlu0 %v1122
        %v1124 = vpop.xlane.xlu0 %1123
        %v1126 = vsel %vm1106, %v1116, 0
        %v1129 = vsel %vm1106, %v1118, 0
        %1131 = vmatprep.subr.mxu0 0.0
        %1132 = vmatpush1.msra.mxu0 %v1017
        %1133 = vmatprep.subr.mxu0 0.0
        %1134 = vmatpush1.msra.mxu0 %v1018
        %1135 = vmatprep.subr.mxu0 0.0
        %1136 = vmatpush1.msra.mxu0 0.0
        %1137 = vmatprep.subr.mxu0 0.0
        %1138 = vmatpush1.msra.mxu0 0.0
        %1139 = vmatprep.subr.mxu0 0.0
        %1140 = vmatpush1.msra.mxu0 0.0
        %1141 = vmatprep.subr.mxu0 0.0
        %1142 = vmatpush1.msra.mxu0 0.0
        %1143 = vmatprep.subr.mxu0 0.0
        %1144 = vmatpush1.msra.mxu0 0.0
        %1145 = vmatprep.subr.mxu0 0.0
        %1146 = vmatpush1.msra.mxu0 0.0
        %1147 = vmatprep.subr.mxu0 0.0
        %1148 = vmatpush1.msra.mxu0 0.0
        %1149 = vmatprep.subr.mxu0 0.0
        %1150 = vmatpush1.msra.mxu0 0.0
        %1151 = vmatprep.subr.mxu0 0.0
        %1152 = vmatpush1.msra.mxu0 0.0
        %1153 = vmatprep.subr.mxu0 0.0
        %1154 = vmatpush1.msra.mxu0 0.0
        %1155 = vmatprep.subr.mxu0 0.0
        %1156 = vmatpush1.msra.mxu0 0.0
        %1157 = vmatprep.subr.mxu0 0.0
        %1158 = vmatpush1.msra.mxu0 0.0
        %1159 = vmatprep.subr.mxu0 0.0
        %1160 = vmatpush1.msra.mxu0 0.0
        %1161 = vmatprep.subr.mxu0 0.0
        %1162 = vmatpush1.msra.mxu0 0.0
        %1163 = vmatprep.subr.mxu0 0.0
        %1164 = vmatpush1.msra.mxu0 0.0
        %1165 = vmatprep.subr.mxu0 0.0
        %1166 = vmatpush1.msra.mxu0 0.0
        %1167 = vmatprep.subr.mxu0 0.0
        %1168 = vmatpush1.msra.mxu0 0.0
        %1169 = vmatprep.subr.mxu0 0.0
        %1170 = vmatpush1.msra.mxu0 0.0
        %1171 = vmatprep.subr.mxu0 0.0
        %1172 = vmatpush1.msra.mxu0 0.0
        %1173 = vmatprep.subr.mxu0 0.0
        %1174 = vmatpush1.msra.mxu0 0.0
        %1175 = vmatprep.subr.mxu0 0.0
        %1176 = vmatpush1.msra.mxu0 0.0
        %1177 = vmatprep.subr.mxu0 0.0
        %1178 = vmatpush1.msra.mxu0 0.0
        %1179 = vmatprep.subr.mxu0 0.0
        %1180 = vmatpush1.msra.mxu0 0.0
        %1181 = vmatprep.subr.mxu0 0.0
        %1182 = vmatpush1.msra.mxu0 0.0
        %1183 = vmatprep.subr.mxu0 0.0
        %1184 = vmatpush1.msra.mxu0 0.0
        %1185 = vmatprep.subr.mxu0 0.0
        %1186 = vmatpush1.msra.mxu0 0.0
        %1187 = vmatprep.subr.mxu0 0.0
        %1188 = vmatpush1.msra.mxu0 0.0
        %1189 = vmatprep.subr.mxu0 0.0
        %1190 = vmatpush1.msra.mxu0 0.0
        %1191 = vmatprep.subr.mxu0 0.0
        %1192 = vmatpush1.msra.mxu0 0.0
        %1193 = vmatprep.subr.mxu0 0.0
        %1194 = vmatpush1.msra.mxu0 0.0
        %1195 = vmatprep.mubr.f32.mxu0 0.0
        %1196 = vmatmul.mubr.f32.gmra.mrb[0].mxu0 %v1126
        %v1197 = vpop.f32.mrb[0].mxu0
        %v1198 = vadd.f32 0.0, %v1197
        %v1199 = vpop.f32.mrb[0].mxu0
        %1200 = vmatprep.mubr.f32.mxu0 0.0
        %1201 = vmatmul.mubr.f32.gmra.mrb[0].mxu0 %v1129
        %v1202 = vpop.f32.mrb[0].mxu0
        %v1203 = vadd.f32 0.0, %v1202
        %v1204 = vpop.f32.mrb[0].mxu0
        %1205 = vdwg.mxu0
        %v1206 = vrcp.pop %v1121
        %v1207 = vrcp.pop %v1124
        %v1208 = vmul.f32 %v1198, %v1206
        %v1209 = vmul.f32 %v1203, %v1207
        %v1210 = vadd.f32 %v1208, 0.0
        %v1211 = vadd.f32 %v1209, 0.0
        %vm1212 = vcmp.ge.s32.totalorder %v1008, 2
        %vm1213 = vcmp.lt.s32.totalorder %v1008, 4
        %vm1214 = vmand %vm1212, %vm1213
        %v1215 = vsel %vm1214, 1, 0
        %v1216 = vcvt.s32.f32 %v1215
        %v1217 = vmul.f32 %v1216, 0.70710677
        %v1218 = vmul.f32 %v829, %v1217
        %v1219 = vmul.f32 %v834, %v1217
        %v1220 = vmul.f32 %v999, %v1216
        %v1221 = vmul.f32 %v1004, %v1216
        %v1223 = vsel %vm751, %v1218, 0
        %v1226 = vsel %vm751, %v1219, 0
        %1228 = vmatprep.subr.mxu0 0.0
        %1229 = vmatpush1.xpose.msra.mxu0 %v1026
        %1230 = vmatprep.subr.mxu0 0.0
        %1231 = vmatpush1.xpose.msra.mxu0 %v1029
        %1232 = vmatprep.subr.mxu0 0.0
        %1233 = vmatpush1.xpose.msra.mxu0 0.0
        %1234 = vmatprep.subr.mxu0 0.0
        %1235 = vmatpush1.xpose.msra.mxu0 0.0
        %1236 = vmatprep.subr.mxu0 0.0
        %1237 = vmatpush1.xpose.msra.mxu0 0.0
        %1238 = vmatprep.subr.mxu0 0.0
        %1239 = vmatpush1.xpose.msra.mxu0 0.0
        %1240 = vmatprep.subr.mxu0 0.0
        %1241 = vmatpush1.xpose.msra.mxu0 0.0
        %1242 = vmatprep.subr.mxu0 0.0
        %1243 = vmatpush1.xpose.msra.mxu0 0.0
        %1244 = vmatprep.subr.mxu0 0.0
        %1245 = vmatpush1.xpose.msra.mxu0 0.0
        %1246 = vmatprep.subr.mxu0 0.0
        %1247 = vmatpush1.xpose.msra.mxu0 0.0
        %1248 = vmatprep.subr.mxu0 0.0
        %1249 = vmatpush1.xpose.msra.mxu0 0.0
        %1250 = vmatprep.subr.mxu0 0.0
        %1251 = vmatpush1.xpose.msra.mxu0 0.0
        %1252 = vmatprep.subr.mxu0 0.0
        %1253 = vmatpush1.xpose.msra.mxu0 0.0
        %1254 = vmatprep.subr.mxu0 0.0
        %1255 = vmatpush1.xpose.msra.mxu0 0.0
        %1256 = vmatprep.subr.mxu0 0.0
        %1257 = vmatpush1.xpose.msra.mxu0 0.0
        %1258 = vmatprep.subr.mxu0 0.0
        %1259 = vmatpush1.xpose.msra.mxu0 0.0
        %1260 = vmatprep.subr.mxu0 0.0
        %1261 = vmatpush1.xpose.msra.mxu0 0.0
        %1262 = vmatprep.subr.mxu0 0.0
        %1263 = vmatpush1.xpose.msra.mxu0 0.0
        %1264 = vmatprep.subr.mxu0 0.0
        %1265 = vmatpush1.xpose.msra.mxu0 0.0
        %1266 = vmatprep.subr.mxu0 0.0
        %1267 = vmatpush1.xpose.msra.mxu0 0.0
        %1268 = vmatprep.subr.mxu0 0.0
        %1269 = vmatpush1.xpose.msra.mxu0 0.0
        %1270 = vmatprep.subr.mxu0 0.0
        %1271 = vmatpush1.xpose.msra.mxu0 0.0
        %1272 = vmatprep.subr.mxu0 0.0
        %1273 = vmatpush1.xpose.msra.mxu0 0.0
        %1274 = vmatprep.subr.mxu0 0.0
        %1275 = vmatpush1.xpose.msra.mxu0 0.0
        %1276 = vmatprep.subr.mxu0 0.0
        %1277 = vmatpush1.xpose.msra.mxu0 0.0
        %1278 = vmatprep.subr.mxu0 0.0
        %1279 = vmatpush1.xpose.msra.mxu0 0.0
        %1280 = vmatprep.subr.mxu0 0.0
        %1281 = vmatpush1.xpose.msra.mxu0 0.0
        %1282 = vmatprep.subr.mxu0 0.0
        %1283 = vmatpush1.xpose.msra.mxu0 0.0
        %1284 = vmatprep.subr.mxu0 0.0
        %1285 = vmatpush1.xpose.msra.mxu0 0.0
        %1286 = vmatprep.subr.mxu0 0.0
        %1287 = vmatpush1.xpose.msra.mxu0 0.0
        %1288 = vmatprep.subr.mxu0 0.0
        %1289 = vmatpush1.xpose.msra.mxu0 0.0
        %1290 = vmatprep.subr.mxu0 0.0
        %1291 = vmatpush1.xpose.msra.mxu0 0.0
        %1292 = vmatprep.mubr.f32.mxu0 0.0
        %1293 = vmatmul.mubr.f32.gmra.mrb[0].mxu0 %v1223
        %v1294 = vpop.f32.mrb[0].mxu0
        %v1295 = vadd.f32 0.0, %v1294
        %v1296 = vpop.f32.mrb[0].mxu0
        %1297 = vmatprep.mubr.f32.mxu0 0.0
        %1298 = vmatmul.mubr.f32.gmra.mrb[0].mxu0 %v1226
        %v1299 = vpop.f32.mrb[0].mxu0
        %v1300 = vadd.f32 0.0, %v1299
        %v1301 = vpop.f32.mrb[0].mxu0
        %1302 = vdwg.mxu0
        %v1303 = vsel %vm1106, %v1295, -inf
        %1304 = vmax.xlane.f32.xlu0 %v1303
        %v1305 = vpop.xlane.xlu0 %1304
        %v1306 = vsel %vm1106, %v1300, -inf
        %1307 = vmax.xlane.f32.xlu0 %v1306
        %v1308 = vpop.xlane.xlu0 %1307
        %v1309 = vsub.f32 %v1295, %v1305
        %v1310 = vsub.f32 %v1300, %v1308
        %v1311 = vmul.f32 %v1309, 1.442695
        %v1312 = vpow.pop %v1311
        %v1313 = vmul.f32 %v1310, 1.442695
        %v1314 = vpow.pop %v1313
        %v1315 = vsel %vm1106, %v1312, 0.0
        %1316 = vadd.xlane.f32.xlu0 %v1315
        %v1317 = vpop.xlane.xlu0 %1316
        %v1318 = vsel %vm1106, %v1314, 0.0
        %1319 = vadd.xlane.f32.xlu0 %v1318
        %v1320 = vpop.xlane.xlu0 %1319
        %v1322 = vsel %vm1106, %v1312, 0
        %v1325 = vsel %vm1106, %v1314, 0
        %1327 = vmatprep.subr.mxu0 0.0
        %1328 = vmatpush1.msra.mxu0 %v1220
        %1329 = vmatprep.subr.mxu0 0.0
        %1330 = vmatpush1.msra.mxu0 %v1221
        %1331 = vmatprep.subr.mxu0 0.0
        %1332 = vmatpush1.msra.mxu0 0.0
        %1333 = vmatprep.subr.mxu0 0.0
        %1334 = vmatpush1.msra.mxu0 0.0
        %1335 = vmatprep.subr.mxu0 0.0
        %1336 = vmatpush1.msra.mxu0 0.0
        %1337 = vmatprep.subr.mxu0 0.0
        %1338 = vmatpush1.msra.mxu0 0.0
        %1339 = vmatprep.subr.mxu0 0.0
        %1340 = vmatpush1.msra.mxu0 0.0
        %1341 = vmatprep.subr.mxu0 0.0
        %1342 = vmatpush1.msra.mxu0 0.0
        %1343 = vmatprep.subr.mxu0 0.0
        %1344 = vmatpush1.msra.mxu0 0.0
        %1345 = vmatprep.subr.mxu0 0.0
        %1346 = vmatpush1.msra.mxu0 0.0
        %1347 = vmatprep.subr.mxu0 0.0
        %1348 = vmatpush1.msra.mxu0 0.0
        %1349 = vmatprep.subr.mxu0 0.0
        %1350 = vmatpush1.msra.mxu0 0.0
        %1351 = vmatprep.subr.mxu0 0.0
        %1352 = vmatpush1.msra.mxu0 0.0
        %1353 = vmatprep.subr.mxu0 0.0
        %1354 = vmatpush1.msra.mxu0 0.0
        %1355 = vmatprep.subr.mxu0 0.0
        %1356 = vmatpush1.msra.mxu0 0.0
        %1357 = vmatprep.subr.mxu0 0.0
        %1358 = vmatpush1.msra.mxu0 0.0
        %1359 = vmatprep.subr.mxu0 0.0
        %1360 = vmatpush1.msra.mxu0 0.0
        %1361 = vmatprep.subr.mxu0 0.0
        %1362 = vmatpush1.msra.mxu0 0.0
        %1363 = vmatprep.subr.mxu0 0.0
        %1364 = vmatpush1.msra.mxu0 0.0
        %1365 = vmatprep.subr.mxu0 0.0
        %1366 = vmatpush1.msra.mxu0 0.0
        %1367 = vmatprep.subr.mxu0 0.0
        %1368 = vmatpush1.msra.mxu0 0.0
        %1369 = vmatprep.subr.mxu0 0.0
        %1370 = vmatpush1.msra.mxu0 0.0
        %1371 = vmatprep.subr.mxu0 0.0
        %1372 = vmatpush1.msra.mxu0 0.0
        %1373 = vmatprep.subr.mxu0 0.0
        %1374 = vmatpush1.msra.mxu0 0.0
        %1375 = vmatprep.subr.mxu0 0.0
        %1376 = vmatpush1.msra.mxu0 0.0
        %1377 = vmatprep.subr.mxu0 0.0
        %1378 = vmatpush1.msra.mxu0 0.0
        %1379 = vmatprep.subr.mxu0 0.0
        %1380 = vmatpush1.msra.mxu0 0.0
        %1381 = vmatprep.subr.mxu0 0.0
        %1382 = vmatpush1.msra.mxu0 0.0
        %1383 = vmatprep.subr.mxu0 0.0
        %1384 = vmatpush1.msra.mxu0 0.0
        %1385 = vmatprep.subr.mxu0 0.0
        %1386 = vmatpush1.msra.mxu0 0.0
        %1387 = vmatprep.subr.mxu0 0.0
        %1388 = vmatpush1.msra.mxu0 0.0
        %1389 = vmatprep.subr.mxu0 0.0
        %1390 = vmatpush1.msra.mxu0 0.0
        %1391 = vmatprep.mubr.f32.mxu0 0.0
        %1392 = vmatmul.mubr.f32.gmra.mrb[0].mxu0 %v1322
        %v1393 = vpop.f32.mrb[0].mxu0
        %v1394 = vadd.f32 0.0, %v1393
        %v1395 = vpop.f32.mrb[0].mxu0
        %1396 = vmatprep.mubr.f32.mxu0 0.0
        %1397 = vmatmul.mubr.f32.gmra.mrb[0].mxu0 %v1325
        %v1398 = vpop.f32.mrb[0].mxu0
        %v1399 = vadd.f32 0.0, %v1398
        %v1400 = vpop.f32.mrb[0].mxu0
        %1401 = vdwg.mxu0
        %v1402 = vrcp.pop %v1317
        %v1403 = vrcp.pop %v1320
        %v1404 = vmul.f32 %v1394, %v1402
        %v1405 = vmul.f32 %v1399, %v1403
        %v1406 = vadd.f32 %v1210, %v1404
        %v1407 = vadd.f32 %v1211, %v1405
        %v1408 = vld [vmem:[#allocation10] sm:$0xf]
        %v1409 = vld [vmem:[#allocation11] sm:$0x1]
        %v1411 = vlaneseq
        %v1412 = vshrl.u32 %v1411, 7
        %v1413 = vsub.s32 0, %v1412
        %v1414 = vrot.slane %v1409, %v1413
        %v1417 = vsel %vm751, %v1406, 0
        %v1420 = vsel %vm751, %v1407, 0
        %v1423 = vsel %vm758, %v1408, 0
        %1425 = vmatprep.subr.mxu0 0.0
        %1426 = vmatpush1.msra.mxu0 %v1423
        %1427 = vmatprep.subr.mxu0 0.0
        %1428 = vmatpush1.msra.mxu0 0.0
        %1429 = vmatprep.subr.mxu0 0.0
        %1430 = vmatpush1.msra.mxu0 0.0
        %1431 = vmatprep.subr.mxu0 0.0
        %1432 = vmatpush1.msra.mxu0 0.0
        %1433 = vmatprep.subr.mxu0 0.0
        %1434 = vmatpush1.msra.mxu0 0.0
        %1435 = vmatprep.subr.mxu0 0.0
        %1436 = vmatpush1.msra.mxu0 0.0
        %1437 = vmatprep.subr.mxu0 0.0
        %1438 = vmatpush1.msra.mxu0 0.0
        %1439 = vmatprep.subr.mxu0 0.0
        %1440 = vmatpush1.msra.mxu0 0.0
        %1441 = vmatprep.subr.mxu0 0.0
        %1442 = vmatpush1.msra.mxu0 0.0
        %1443 = vmatprep.subr.mxu0 0.0
        %1444 = vmatpush1.msra.mxu0 0.0
        %1445 = vmatprep.subr.mxu0 0.0
        %1446 = vmatpush1.msra.mxu0 0.0
        %1447 = vmatprep.subr.mxu0 0.0
        %1448 = vmatpush1.msra.mxu0 0.0
        %1449 = vmatprep.subr.mxu0 0.0
        %1450 = vmatpush1.msra.mxu0 0.0
        %1451 = vmatprep.subr.mxu0 0.0
        %1452 = vmatpush1.msra.mxu0 0.0
        %1453 = vmatprep.subr.mxu0 0.0
        %1454 = vmatpush1.msra.mxu0 0.0
        %1455 = vmatprep.subr.mxu0 0.0
        %1456 = vmatpush1.msra.mxu0 0.0
        %1457 = vmatprep.subr.mxu0 0.0
        %1458 = vmatpush1.msra.mxu0 0.0
        %1459 = vmatprep.subr.mxu0 0.0
        %1460 = vmatpush1.msra.mxu0 0.0
        %1461 = vmatprep.subr.mxu0 0.0
        %1462 = vmatpush1.msra.mxu0 0.0
        %1463 = vmatprep.subr.mxu0 0.0
        %1464 = vmatpush1.msra.mxu0 0.0
        %1465 = vmatprep.subr.mxu0 0.0
        %1466 = vmatpush1.msra.mxu0 0.0
        %1467 = vmatprep.subr.mxu0 0.0
        %1468 = vmatpush1.msra.mxu0 0.0
        %1469 = vmatprep.subr.mxu0 0.0
        %1470 = vmatpush1.msra.mxu0 0.0
        %1471 = vmatprep.subr.mxu0 0.0
        %1472 = vmatpush1.msra.mxu0 0.0
        %1473 = vmatprep.subr.mxu0 0.0
        %1474 = vmatpush1.msra.mxu0 0.0
        %1475 = vmatprep.subr.mxu0 0.0
        %1476 = vmatpush1.msra.mxu0 0.0
        %1477 = vmatprep.subr.mxu0 0.0
        %1478 = vmatpush1.msra.mxu0 0.0
        %1479 = vmatprep.subr.mxu0 0.0
        %1480 = vmatpush1.msra.mxu0 0.0
        %1481 = vmatprep.subr.mxu0 0.0
        %1482 = vmatpush1.msra.mxu0 0.0
        %1483 = vmatprep.subr.mxu0 0.0
        %1484 = vmatpush1.msra.mxu0 0.0
        %1485 = vmatprep.subr.mxu0 0.0
        %1486 = vmatpush1.msra.mxu0 0.0
        %1487 = vmatprep.subr.mxu0 0.0
        %1488 = vmatpush1.msra.mxu0 0.0
        %1489 = vmatprep.mubr.f32.mxu0 0.0
        %1490 = vmatmul.mubr.f32.gmra.mrb[0].mxu0 %v1417
        %v1491 = vpop.f32.mrb[0].mxu0
        %v1492 = vadd.f32 %v1414, %v1491
        %v1493 = vpop.f32.mrb[0].mxu0
        %1494 = vmatprep.mubr.f32.mxu0 0.0
        %1495 = vmatmul.mubr.f32.gmra.mrb[0].mxu0 %v1420
        %v1496 = vpop.f32.mrb[0].mxu0
        %v1497 = vadd.f32 %v1414, %v1496
        %v1498 = vpop.f32.mrb[0].mxu0
        %1499 = vdwg.mxu0
        %v1500 = vadd.f32 %v1492, %v732
        %v1501 = vadd.f32 %v1497, %v737
        %v1502 = vsel %vm751, %v1500, 0.0
        %1503 = vadd.xlane.f32.xlu0 %v1502
        %v1504 = vpop.xlane.xlu0 %1503
        %v1505 = vsel %vm751, %v1501, 0.0
        %1506 = vadd.xlane.f32.xlu0 %v1505
        %v1507 = vpop.xlane.xlu0 %1506
        %v1508 = vrcp.pop 4.0
        %v1509 = vmul.f32 %v1504, %v1508
        %v1510 = vmul.f32 %v1507, %v1508
        %v1511 = vsub.f32 %v1500, %v1509
        %v1512 = vsub.f32 %v1501, %v1510
        %v1513 = vmul.f32 %v1511, %v1511
        %v1514 = vmul.f32 %v1512, %v1512
        %v1515 = vsel %vm751, %v1513, 0.0
        %1516 = vadd.xlane.f32.xlu0 %v1515
        %v1517 = vpop.xlane.xlu0 %1516
        %v1518 = vsel %vm751, %v1514, 0.0
        %1519 = vadd.xlane.f32.xlu0 %v1518
        %v1520 = vpop.xlane.xlu0 %1519
        %v1521 = vmul.f32 %v1517, %v1508
        %v1522 = vmul.f32 %v1520, %v1508
        %v1523 = vadd.f32 %v1521, 1e-05
        %v1524 = vadd.f32 %v1522, 1e-05
        %v1525 = vrsqrt.pop %v1523
        %v1526 = vrsqrt.pop %v1524
        %v1527 = vmul.f32 %v1511, %v1525
        %v1528 = vmul.f32 %v1512, %v1526
        %v1529 = vld [vmem:[#allocation13] sm:$0x1]
        %v1531 = vlaneseq
        %v1532 = vshrl.u32 %v1531, 7
        %v1533 = vsub.s32 0, %v1532
        %v1534 = vrot.slane %v1529, %v1533
        %v1536 = vmul.f32 %v1527, %v1534
        %v1537 = vmul.f32 %v1528, %v1534
        %v1538 = vld [vmem:[%s10] sm:$0x1]
        %v1540 = vlaneseq
        %v1541 = vshrl.u32 %v1540, 7
        %v1542 = vsub.s32 0, %v1541
        %v1543 = vrot.slane %v1538, %v1542
        %v1545 = vadd.f32 %v1536, %v1543
        %v1546 = vadd.f32 %v1537, %v1543
        %v1547 = vld [vmem:[%s11] sm:$0xf]
        %v1548 = vld [vmem:[%s12] sm:$0x1]
        %v1550 = vlaneseq
        %v1551 = vshrl.u32 %v1550, 7
        %v1552 = vsub.s32 0, %v1551
        %v1553 = vrot.slane %v1548, %v1552
        %v1556 = vsel %vm751, %v1545, 0
        %v1559 = vsel %vm751, %v1546, 0
        %v1562 = vsel %vm758, %v1547, 0
        %1564 = vmatprep.subr.mxu0 0.0
        %1565 = vmatpush1.msra.mxu0 %v1562
        %1566 = vmatprep.subr.mxu0 0.0
        %1567 = vmatpush1.msra.mxu0 0.0
        %1568 = vmatprep.subr.mxu0 0.0
        %1569 = vmatpush1.msra.mxu0 0.0
        %1570 = vmatprep.subr.mxu0 0.0
        %1571 = vmatpush1.msra.mxu0 0.0
        %1572 = vmatprep.subr.mxu0 0.0
        %1573 = vmatpush1.msra.mxu0 0.0
        %1574 = vmatprep.subr.mxu0 0.0
        %1575 = vmatpush1.msra.mxu0 0.0
        %1576 = vmatprep.subr.mxu0 0.0
        %1577 = vmatpush1.msra.mxu0 0.0
        %1578 = vmatprep.subr.mxu0 0.0
        %1579 = vmatpush1.msra.mxu0 0.0
        %1580 = vmatprep.subr.mxu0 0.0
        %1581 = vmatpush1.msra.mxu0 0.0
        %1582 = vmatprep.subr.mxu0 0.0
        %1583 = vmatpush1.msra.mxu0 0.0
        %1584 = vmatprep.subr.mxu0 0.0
        %1585 = vmatpush1.msra.mxu0 0.0
        %1586 = vmatprep.subr.mxu0 0.0
        %1587 = vmatpush1.msra.mxu0 0.0
        %1588 = vmatprep.subr.mxu0 0.0
        %1589 = vmatpush1.msra.mxu0 0.0
        %1590 = vmatprep.subr.mxu0 0.0
        %1591 = vmatpush1.msra.mxu0 0.0
        %1592 = vmatprep.subr.mxu0 0.0
        %1593 = vmatpush1.msra.mxu0 0.0
        %1594 = vmatprep.subr.mxu0 0.0
        %1595 = vmatpush1.msra.mxu0 0.0
        %1596 = vmatprep.subr.mxu0 0.0
        %1597 = vmatpush1.msra.mxu0 0.0
        %1598 = vmatprep.subr.mxu0 0.0
        %1599 = vmatpush1.msra.mxu0 0.0
        %1600 = vmatprep.subr.mxu0 0.0
        %1601 = vmatpush1.msra.mxu0 0.0
        %1602 = vmatprep.subr.mxu0 0.0
        %1603 = vmatpush1.msra.mxu0 0.0
        %1604 = vmatprep.subr.mxu0 0.0
        %1605 = vmatpush1.msra.mxu0 0.0
        %1606 = vmatprep.subr.mxu0 0.0
        %1607 = vmatpush1.msra.mxu0 0.0
        %1608 = vmatprep.subr.mxu0 0.0
        %1609 = vmatpush1.msra.mxu0 0.0
        %1610 = vmatprep.subr.mxu0 0.0
        %1611 = vmatpush1.msra.mxu0 0.0
        %1612 = vmatprep.subr.mxu0 0.0
        %1613 = vmatpush1.msra.mxu0 0.0
        %1614 = vmatprep.subr.mxu0 0.0
        %1615 = vmatpush1.msra.mxu0 0.0
        %1616 = vmatprep.subr.mxu0 0.0
        %1617 = vmatpush1.msra.mxu0 0.0
        %1618 = vmatprep.subr.mxu0 0.0
        %1619 = vmatpush1.msra.mxu0 0.0
        %1620 = vmatprep.subr.mxu0 0.0
        %1621 = vmatpush1.msra.mxu0 0.0
        %1622 = vmatprep.subr.mxu0 0.0
        %1623 = vmatpush1.msra.mxu0 0.0
        %1624 = vmatprep.subr.mxu0 0.0
        %1625 = vmatpush1.msra.mxu0 0.0
        %1626 = vmatprep.subr.mxu0 0.0
        %1627 = vmatpush1.msra.mxu0 0.0
        %1628 = vmatprep.mubr.f32.mxu0 0.0
        %1629 = vmatmul.mubr.f32.gmra.mrb[0].mxu0 %v1556
        %v1630 = vpop.f32.mrb[0].mxu0
        %v1631 = vadd.f32 %v1553, %v1630
        %v1632 = vpop.f32.mrb[0].mxu0
        %1633 = vmatprep.mubr.f32.mxu0 0.0
        %1634 = vmatmul.mubr.f32.gmra.mrb[0].mxu0 %v1559
        %v1635 = vpop.f32.mrb[0].mxu0
        %v1636 = vadd.f32 %v1553, %v1635
        %v1637 = vpop.f32.mrb[0].mxu0
        %1638 = vdwg.mxu0
        %v1639 = vld [vmem:[%s694] sm:$0xff]
        %v1640 = vld [vmem:[%s694 + $0x8] sm:$0xff]
        %v1641 = vld [vmem:[%s14] sm:$0xff]
        %v1642 = vld [vmem:[%s14 + $0x8] sm:$0xff]
        %v1643 = vld [vmem:[%s14 + $0x10] sm:$0xff]
        %v1644 = vld [vmem:[%s14 + $0x18] sm:$0xff]
        %v1645 = vld [vmem:[%s13] sm:$0xff]
        %v1646 = vld [vmem:[%s13 + $0x8] sm:$0xff]
        %v1647 = vld [vmem:[%s13 + $0x10] sm:$0xff]
        %v1648 = vld [vmem:[%s13 + $0x18] sm:$0xff]
        %vm1649 = vcmask 261120
        %v1651 = vsel %vm1649, %v1631, 0
        %v1654 = vsel %vm1649, %v1636, 0
        %1656 = vmatprep.subr.mxu0 0.0
        %1657 = vmatpush1.msra.mxu0 %v1641
        %1658 = vmatprep.subr.mxu0 0.0
        %1659 = vmatpush1.msra.mxu0 %v1642
        %1660 = vmatprep.subr.mxu0 0.0
        %1661 = vmatpush1.msra.mxu0 %v1643
        %1662 = vmatprep.subr.mxu0 0.0
        %1663 = vmatpush1.msra.mxu0 %v1644
        %1664 = vmatprep.subr.mxu0 0.0
        %1665 = vmatpush1.msra.mxu0 0.0
        %1666 = vmatprep.subr.mxu0 0.0
        %1667 = vmatpush1.msra.mxu0 0.0
        %1668 = vmatprep.subr.mxu0 0.0
        %1669 = vmatpush1.msra.mxu0 0.0
        %1670 = vmatprep.subr.mxu0 0.0
        %1671 = vmatpush1.msra.mxu0 0.0
        %1672 = vmatprep.subr.mxu0 0.0
        %1673 = vmatpush1.msra.mxu0 0.0
        %1674 = vmatprep.subr.mxu0 0.0
        %1675 = vmatpush1.msra.mxu0 0.0
        %1676 = vmatprep.subr.mxu0 0.0
        %1677 = vmatpush1.msra.mxu0 0.0
        %1678 = vmatprep.subr.mxu0 0.0
        %1679 = vmatpush1.msra.mxu0 0.0
        %1680 = vmatprep.subr.mxu0 0.0
        %1681 = vmatpush1.msra.mxu0 0.0
        %1682 = vmatprep.subr.mxu0 0.0
        %1683 = vmatpush1.msra.mxu0 0.0
        %1684 = vmatprep.subr.mxu0 0.0
        %1685 = vmatpush1.msra.mxu0 0.0
        %1686 = vmatprep.subr.mxu0 0.0
        %1687 = vmatpush1.msra.mxu0 0.0
        %1688 = vmatprep.subr.mxu0 0.0
        %1689 = vmatpush1.msra.mxu0 0.0
        %1690 = vmatprep.subr.mxu0 0.0
        %1691 = vmatpush1.msra.mxu0 0.0
        %1692 = vmatprep.subr.mxu0 0.0
        %1693 = vmatpush1.msra.mxu0 0.0
        %1694 = vmatprep.subr.mxu0 0.0
        %1695 = vmatpush1.msra.mxu0 0.0
        %1696 = vmatprep.subr.mxu0 0.0
        %1697 = vmatpush1.msra.mxu0 0.0
        %1698 = vmatprep.subr.mxu0 0.0
        %1699 = vmatpush1.msra.mxu0 0.0
        %1700 = vmatprep.subr.mxu0 0.0
        %1701 = vmatpush1.msra.mxu0 0.0
        %1702 = vmatprep.subr.mxu0 0.0
        %1703 = vmatpush1.msra.mxu0 0.0
        %1704 = vmatprep.subr.mxu0 0.0
        %1705 = vmatpush1.msra.mxu0 0.0
        %1706 = vmatprep.subr.mxu0 0.0
        %1707 = vmatpush1.msra.mxu0 0.0
        %1708 = vmatprep.subr.mxu0 0.0
        %1709 = vmatpush1.msra.mxu0 0.0
        %1710 = vmatprep.subr.mxu0 0.0
        %1711 = vmatpush1.msra.mxu0 0.0
        %1712 = vmatprep.subr.mxu0 0.0
        %1713 = vmatpush1.msra.mxu0 0.0
        %1714 = vmatprep.subr.mxu0 0.0
        %1715 = vmatpush1.msra.mxu0 0.0
        %1716 = vmatprep.subr.mxu0 0.0
        %1717 = vmatpush1.msra.mxu0 0.0
        %1718 = vmatprep.subr.mxu0 0.0
        %1719 = vmatpush1.msra.mxu0 0.0
        %1720 = vmatprep.mubr.f32.mxu0 0.0
        %1721 = vmatmul.mubr.f32.gmra.mrb[0].mxu0 %v1651
        %v1722 = vpop.f32.mrb[0].mxu0
        %v1723 = vadd.f32 0.0, %v1722
        %v1724 = vpop.f32.mrb[0].mxu0
        %1725 = vmatprep.mubr.f32.mxu0 0.0
        %1726 = vmatmul.mubr.f32.gmra.mrb[0].mxu0 %v1654
        %v1727 = vpop.f32.mrb[0].mxu0
        %v1728 = vadd.f32 0.0, %v1727
        %v1729 = vpop.f32.mrb[0].mxu0
        %1730 = vdwg.mxu0
        %v1732 = vsel %vm1649, %v1639, 0
        %v1735 = vsel %vm1649, %v1640, 0
        %1737 = vmatprep.subr.mxu0 0.0
        %1738 = vmatpush1.msra.mxu0 %v1645
        %1739 = vmatprep.subr.mxu0 0.0
        %1740 = vmatpush1.msra.mxu0 %v1646
        %1741 = vmatprep.subr.mxu0 0.0
        %1742 = vmatpush1.msra.mxu0 %v1647
        %1743 = vmatprep.subr.mxu0 0.0
        %1744 = vmatpush1.msra.mxu0 %v1648
        %1745 = vmatprep.subr.mxu0 0.0
        %1746 = vmatpush1.msra.mxu0 0.0
        %1747 = vmatprep.subr.mxu0 0.0
        %1748 = vmatpush1.msra.mxu0 0.0
        %1749 = vmatprep.subr.mxu0 0.0
        %1750 = vmatpush1.msra.mxu0 0.0
        %1751 = vmatprep.subr.mxu0 0.0
        %1752 = vmatpush1.msra.mxu0 0.0
        %1753 = vmatprep.subr.mxu0 0.0
        %1754 = vmatpush1.msra.mxu0 0.0
        %1755 = vmatprep.subr.mxu0 0.0
        %1756 = vmatpush1.msra.mxu0 0.0
        %1757 = vmatprep.subr.mxu0 0.0
        %1758 = vmatpush1.msra.mxu0 0.0
        %1759 = vmatprep.subr.mxu0 0.0
        %1760 = vmatpush1.msra.mxu0 0.0
        %1761 = vmatprep.subr.mxu0 0.0
        %1762 = vmatpush1.msra.mxu0 0.0
        %1763 = vmatprep.subr.mxu0 0.0
        %1764 = vmatpush1.msra.mxu0 0.0
        %1765 = vmatprep.subr.mxu0 0.0
        %1766 = vmatpush1.msra.mxu0 0.0
        %1767 = vmatprep.subr.mxu0 0.0
        %1768 = vmatpush1.msra.mxu0 0.0
        %1769 = vmatprep.subr.mxu0 0.0
        %1770 = vmatpush1.msra.mxu0 0.0
        %1771 = vmatprep.subr.mxu0 0.0
        %1772 = vmatpush1.msra.mxu0 0.0
        %1773 = vmatprep.subr.mxu0 0.0
        %1774 = vmatpush1.msra.mxu0 0.0
        %1775 = vmatprep.subr.mxu0 0.0
        %1776 = vmatpush1.msra.mxu0 0.0
        %1777 = vmatprep.subr.mxu0 0.0
        %1778 = vmatpush1.msra.mxu0 0.0
        %1779 = vmatprep.subr.mxu0 0.0
        %1780 = vmatpush1.msra.mxu0 0.0
        %1781 = vmatprep.subr.mxu0 0.0
        %1782 = vmatpush1.msra.mxu0 0.0
        %1783 = vmatprep.subr.mxu0 0.0
        %1784 = vmatpush1.msra.mxu0 0.0
        %1785 = vmatprep.subr.mxu0 0.0
        %1786 = vmatpush1.msra.mxu0 0.0
        %1787 = vmatprep.subr.mxu0 0.0
        %1788 = vmatpush1.msra.mxu0 0.0
        %1789 = vmatprep.subr.mxu0 0.0
        %1790 = vmatpush1.msra.mxu0 0.0
        %1791 = vmatprep.subr.mxu0 0.0
        %1792 = vmatpush1.msra.mxu0 0.0
        %1793 = vmatprep.subr.mxu0 0.0
        %1794 = vmatpush1.msra.mxu0 0.0
        %1795 = vmatprep.subr.mxu0 0.0
        %1796 = vmatpush1.msra.mxu0 0.0
        %1797 = vmatprep.subr.mxu0 0.0
        %1798 = vmatpush1.msra.mxu0 0.0
        %1799 = vmatprep.subr.mxu0 0.0
        %1800 = vmatpush1.msra.mxu0 0.0
        %1801 = vmatprep.mubr.f32.mxu0 0.0
        %1802 = vmatmul.mubr.f32.gmra.mrb[0].mxu0 %v1732
        %v1803 = vpop.f32.mrb[0].mxu0
        %v1804 = vadd.f32 %v1723, %v1803
        %v1805 = vpop.f32.mrb[0].mxu0
        %1806 = vmatprep.mubr.f32.mxu0 0.0
        %1807 = vmatmul.mubr.f32.gmra.mrb[0].mxu0 %v1735
        %v1808 = vpop.f32.mrb[0].mxu0
        %v1809 = vadd.f32 %v1728, %v1808
        %v1810 = vpop.f32.mrb[0].mxu0
        %1811 = vdwg.mxu0
        %v1812 = vld [vmem:[%s15] sm:$0x1]
        %v1814 = vlaneseq
        %v1815 = vshrl.u32 %v1814, 7
        %v1816 = vsub.s32 0, %v1815
        %v1817 = vrot.slane %v1812, %v1816
        %v1819 = vadd.f32 %v1804, %v1817
        %v1820 = vadd.f32 %v1809, %v1817
        %1821 = vst [vmem:[%s670] sm:$0xff] %v1819
        %1822 = vst [vmem:[%s670 + $0x8] sm:$0xff] %v1820
        %s1823 = sand.u32 %s411, 1
        %s1824 = scalar_lea.sflag [#allocation4], %s1823
        %s1825 = sand.u32 %s411, 1
        %s1826 = smul.addr %s1825, 16
        %s1827 = scalar_lea.vmem [#allocation14], %s1826
        // Predicated region
        $region113: #{tpu_custom_call.1} parent=83 // pred_check
          %p1828 = pneg %p421
        $region114: #{tpu_custom_call.1} parent=83 // pred_check_branch
          %1830 = sbr.rel (%p1828) target = $region116
        $region115: #{tpu_custom_call.1} parent=83 // pred_region
          %s1831 = smul.u32 2, %s39
          %s1833 = ssub.s32 256, 256
          %1834 = vsyncadd %s1824, %s1833
          %s1835 = smul.addr %s38, 2
          %s1836 = sadd.s32 %s1831, %s1835
          %s1837 = smul.addr %s1836, 128
          %s1838 = scalar_lea.hbm %s16, %s1837
          %s1839 = sshll.u32 %s1827, 4
          %s1840 = int_to_ptr.vmem [resolvable:$true] %s1839
          %1845 = dma.vmem_to_hbm [thread:$0]  %s1840, 256, %s1838, %s1824, 128, 128, 8
        $region116: #{tpu_custom_call.1} parent=83 // pred_fallthru
          _
      $region84: #{tpu_custom_call.1} parent=5 // pred_fallthru
        _
      %p1846 = scmp.le.s32.totalorder 2, %s29
      // Predicated region
      $region117: #{tpu_custom_call.1} parent=5 // pred_check
        %p1847 = pneg %p1846
      $region118: #{tpu_custom_call.1} parent=5 // pred_check_branch
        %1849 = sbr.rel (%p1847) target = $region120
      $region119: #{tpu_custom_call.1} parent=5 // pred_region
        %s1850 = ssub.s32 %s29, 2
        // Predicated region
        $region121: #{tpu_custom_call.1} parent=119 // pred_check
          %p1851 = pneg %p427
        $region122: #{tpu_custom_call.1} parent=119 // pred_check_branch
          %1853 = sbr.rel (%p1851) target = $region124
        $region123: #{tpu_custom_call.1} parent=119 // pred_region
          %s1854 = sand.u32 %s412, 1
          %s1855 = scalar_lea.sflag [#allocation4], %s1854
          %s1856 = sand.u32 %s412, 1
          %s1857 = smul.addr %s1856, 16
          %s1858 = scalar_lea.vmem [#allocation14], %s1857
          %1859 = dma.done %s1855, 256
        $region124: #{tpu_custom_call.1} parent=119 // pred_fallthru
          _
      $region120: #{tpu_custom_call.1} parent=5 // pred_fallthru
        _
    $region6: #{tpu_custom_call.1} parent=1 // loop_footer
      %s33 = sadd.s32 1, %s29
    $region7: #{tpu_custom_call.1} parent=1 // loop_footer_branch
      %28 = sbr.rel target = $region3
    $region8: #{tpu_custom_call.1} parent=1 // loop_exit
      _
    %1860 = vsyncpa [#allocation3], 1
    %s1861 = scalar_lea.sflag [#allocation3], 1
    %1862 = vsyncpa %s1861, 1
    %1863 = vsyncpa [#allocation6], 1
    %1864 = vsyncpa [#allocation9], 1
    %1865 = vsyncpa [#allocation12], 1
    %1866 = vsyncpa [#allocation4], 1
    %s1867 = scalar_lea.sflag [#allocation4], 1
    %1868 = vsyncpa %s1867, 1

</llo_original>
